<compile_context>
chip_gen: v6e
topology: v6e:2x2x1
jax: 0.10.0
libtpu: 0.0.40
codegen_flags: <defaults>
</compile_context>

<pallas_src>
import functools

import jax
import jax.numpy as jnp
from jax.experimental import pallas as pl
from jax.experimental.pallas import tpu as pltpu

# Fixed perception filters (applied depthwise, shared across channels).
_SOBEL_X = [[-1.0, 0.0, 1.0], [-2.0, 0.0, 2.0], [-1.0, 0.0, 1.0]]
_SOBEL_Y = [[-1.0, -2.0, -1.0], [0.0, 0.0, 0.0], [1.0, 2.0, 1.0]]
_LAPLACE = [[1.0, 2.0, 1.0], [2.0, -12.0, 2.0], [1.0, 2.0, 1.0]]


def _nca_kernel(x_ref, w1_ref, b1_ref, w2_ref, o_ref, *,
                width, sample, block_n, steps):
    """x_ref/o_ref: (C, L) with L = block_n * H * W (lane-dense, channel-major).

    width = W (row length), sample = H*W (per-sample flat size).
    Torus (circular) boundary conditions in both H and W, per sample.
    """
    c, l = x_ref.shape
    w1 = w1_ref[...]                       # (Hd, 4C)  shared, rank-2
    w2 = w2_ref[...]                       # (C, Hd)   shared, rank-2
    bias = b1_ref[...][:, 0:1]             # (Hd, 1); padded to 128 lanes in HBM

    def rot(a, k):                         # lane roll on the XLU (jnp.roll sem.)
        k = k % l
        if k == 0:
            return a
        return pltpu.roll(a, k, 1)

    # Boundary masks: computed once, hoisted out of the multi-step loop.
    lane = jax.lax.broadcasted_iota(jnp.int32, (c, l), 1)
    col = lane % width                     # column within a row
    at_right = col == width - 1
    at_left = col == 0
    if block_n > 1:                        # sample boundaries inside the block
        pos = lane % sample
        at_top = pos < width
        at_bot = pos >= sample - width

    def up(a):                             # value at (i-1, j), wrap per sample
        r = rot(a, width)
        if block_n == 1:                   # block == one sample: wrap at L == S
            return r
        return jnp.where(at_top, rot(a, width - sample), r)

    def down(a):                           # value at (i+1, j), wrap per sample
        r = rot(a, -width)
        if block_n == 1:
            return r
        return jnp.where(at_bot, rot(a, sample - width), r)

    def step(state):
        # Horizontal neighbours: roll +/-1 with a row-boundary fix-up.
        x_r = jnp.where(at_right, rot(state, width - 1), rot(state, -1))
        x_l = jnp.where(at_left, rot(state, 1 - width), rot(state, 1))
        hdiff = x_r - x_l                  # row stencil [-1, 0, +1]
        hplus = x_l + 2.0 * state + x_r    # row stencil [ 1, 2,  1]
        # Sobel-x / Sobel-y / Laplacian from vertical shifts of the row combos.
        gx = (up(hdiff) + down(hdiff) + 2.0 * hdiff) * 0.125
        s_top = up(hplus)
        s_bot = down(hplus)
        gy = (s_bot - s_top) * 0.125
        lap = (s_top + s_bot + 2.0 * hplus - 16.0 * state) * 0.0625
        # Fused update MLP: one K=4C matmul (sublane-only concat is cheap),
        # relu, then the 1x1 output conv.  f32 operands, f32 accumulation.
        feat = jnp.concatenate([state, gx, gy, lap], axis=0)      # (4C, L)
        hid = jnp.maximum(
            jnp.dot(w1, feat, preferred_element_type=jnp.float32) + bias, 0.0)
        dx = jnp.dot(w2, hid, preferred_element_type=jnp.float32)  # (C, L)
        return state + dx                  # residual cell update

    x = x_ref[...]
    if steps <= 1:
        out = step(x)
    else:
        # Fused multi-step rollout: cell state stays on-chip between steps.
        out = jax.lax.fori_loop(0, steps, lambda _, s_: step(s_), x)
    o_ref[...] = out


def _num_tensorcores():
    """Best-effort TensorCores-per-device query.  Defaults to 2 so a megacore
    chip (v7x / v4 / v5p) never idles a core; on single-core v5e/v6e that only
    costs one extra ~0.35us grid step."""
    try:
        dev = jax.devices()[0]
        for name in ("num_cores", "core_count"):
            v = getattr(dev, name, None)
            if isinstance(v, int) and v > 0:
                return v
        kind = str(getattr(dev, "device_kind", "")).lower()
        if any(t in kind for t in ("lite", "v5e", "v6e", "v2", "v3")):
            return 1                       # single TensorCore per device
    except Exception:
        pass
    return 2


def _pick_block_n(n, c, s, num_cores):
    """Largest batch-per-block that (a) leaves >= num_cores grid steps when the
    chip has >1 TensorCore, (b) keeps the lane dim (8,128)-aligned and (c)
    keeps the f32 input block under a VMEM-friendly byte cap."""
    max_block_bytes = 2 * 1024 * 1024      # x-block; live intermediates ~6x this
    min_steps = min(max(num_cores, 1), n)
    best = None
    for b in range(1, n + 1):
        if n % b:
            continue
        if (b * s) % 128 != 0 and b != n:
            continue
        if n // b < min_steps:
            continue
        if c * b * s * 4 > max_block_bytes:
            continue
        best = b
    if best is None:                       # any layout-legal divisor
        best = next(b for b in range(1, n + 1)
                    if n % b == 0 and ((b * s) % 128 == 0 or b == n))
    return best


@functools.partial(jax.jit, static_argnames=("block_n", "steps"))
def nca_forward(x, w1, b1, w2, *, block_n=None, steps=1):
    """x: (N, C, H, W) f32; w1: (Hd, 4C); b1: (Hd, 1); w2: (C, Hd).

    Applies `steps` fused NCA update steps (steps=1 == module forward)."""
    n, c, h, w = x.shape
    hd = w1.shape[0]
    s = h * w

    # Channel-major, lane-flattened layout (C, N*S): the kernel sees 2-D slabs,
    # stores are full lane width, and the batch never enters the matmuls.
    xf = x.reshape(n, c, s).transpose(1, 0, 2).reshape(c, n * s)
    # Bias padded to a full 128-lane block (no last-dim-1 transfers).
    b1p = jnp.pad(b1.reshape(hd, 1).astype(x.dtype), ((0, 0), (0, 127)))

    if block_n is None:
        block_n = _pick_block_n(n, c, s, _num_tensorcores())
    assert n % block_n == 0, (n, block_n)
    l_blk = block_n * s

    kernel = functools.partial(_nca_kernel, width=w, sample=s,
                               block_n=block_n, steps=steps)
    out = pl.pallas_call(
        kernel,
        out_shape=jax.ShapeDtypeStruct((c, n * s), x.dtype),
        grid_spec=pl.GridSpec(
            grid=(n // block_n,),
            in_specs=[
                pl.BlockSpec((c, l_blk), lambda i: (0, i)),    # state slab
                pl.BlockSpec((hd, 4 * c), lambda i: (0, 0)),   # W1 (resident)
                pl.BlockSpec((hd, 128), lambda i: (0, 0)),     # bias (padded)
                pl.BlockSpec((c, hd), lambda i: (0, 0)),       # W2 (resident)
            ],
            out_specs=pl.BlockSpec((c, l_blk), lambda i: (0, i)),
        ),
        compiler_params=pltpu.CompilerParams(
            dimension_semantics=("parallel",),
            vmem_limit_bytes=32 * 1024 * 1024),
    )(xf, w1, b1p, w2)
    return out.reshape(c, n, s).transpose(1, 0, 2).reshape(n, c, h, w)


# ---------------------------------------------------------------------------
# Plain-JAX reference (independent code path: 2-D rolls on (C,H,W), concat +
# full-width f32 matmuls) — validates the flat-layout shift fix-ups and the
# fused MLP in the kernel.
# ---------------------------------------------------------------------------
def _depthwise3x3_2d(x, kern):
    out = jnp.zeros_like(x)
    for u in (-1, 0, 1):
        for v in (-1, 0, 1):
            wgt = kern[u + 1][v + 1]
            if wgt == 0.0:
                continue
            out = out + wgt * jnp.roll(x, shift=(-u, -v), axis=(-2, -1))
    return out


def _reference(x, w1, b1, w2):
    n, c, h, w = x.shape
    hi = jax.lax.Precision.HIGHEST

    def per_batch(xi):
        gx = _depthwise3x3_2d(xi, _SOBEL_X) * 0.125
        gy = _depthwise3x3_2d(xi, _SOBEL_Y) * 0.125
        lp = _depthwise3x3_2d(xi, _LAPLACE) * 0.0625
        p = jnp.concatenate([xi, gx, gy, lp], axis=0).reshape(4 * c, h * w)
        hid = jnp.maximum(jnp.dot(w1, p, precision=hi) + b1, 0.0)
        return (xi.reshape(c, h * w) + jnp.dot(w2, hid, precision=hi)).reshape(c, h, w)

    return jax.vmap(per_batch)(x)


if __name__ == "__main__":
    # Small, deterministic example shapes (typical NCA pool batch).
    N, C, H, W = 8, 8, 16, 16
    HIDDEN = 32

    key = jax.random.PRNGKey(0)
    kx, k1, kb, k2 = jax.random.split(key, 4)

    x = jax.random.normal(kx, (N, C, H, W), dtype=jnp.float32)
    w1 = jax.random.normal(k1, (HIDDEN, 4 * C), dtype=jnp.float32) * 0.1
    b1 = jax.random.normal(kb, (HIDDEN, 1), dtype=jnp.float32) * 0.01
    w2 = jax.random.normal(k2, (C, HIDDEN), dtype=jnp.float32) * 0.1

    # Single update step (== module forward).
    out = jax.block_until_ready(nca_forward(x, w1, b1, w2))
    ref = _reference(x, w1, b1, w2)
    assert out.shape == (N, C, H, W)
    err = float(jnp.max(jnp.abs(out - ref)))
    assert jnp.allclose(out, ref, atol=1e-2, rtol=1e-2), err

    # Fused multi-step rollout (state kept on-chip across steps).
    T = 4
    out_t = jax.block_until_ready(nca_forward(x, w1, b1, w2, steps=T))
    ref_t = x
    for _ in range(T):
        ref_t = _reference(ref_t, w1, b1, w2)
    err_t = float(jnp.max(jnp.abs(out_t - ref_t)))
    assert jnp.allclose(out_t, ref_t, atol=2e-2, rtol=2e-2), err_t

    print("KERNEL_OK")
</pallas_src>

<mosaic_0001>
module attributes {stable_mosaic.version = 11 : i64} {
  func.func @_nca_kernel(%arg0: i32, %arg1: memref<8x1024xf32, #tpu.memory_space<vmem>>, %arg2: memref<32x32xf32, #tpu.memory_space<vmem>>, %arg3: memref<32x128xf32, #tpu.memory_space<vmem>>, %arg4: memref<8x32xf32, #tpu.memory_space<vmem>>, %arg5: memref<8x1024xf32, #tpu.memory_space<vmem>>) attributes {dimension_semantics = [#tpu.dimension_semantics<parallel>], iteration_bounds = array<i64: 2>, scalar_prefetch = 0 : i64, scratch_operands = 0 : i64, tpu.core_type = #tpu.core_type<tc>, window_params = [{transform_indices = @transform_0, window_bounds = array<i64: 8, 1024>}, {pipeline_mode = #tpu.pipeline_mode<synchronous>, transform_indices = @transform_1, window_bounds = array<i64: 32, 32>}, {pipeline_mode = #tpu.pipeline_mode<synchronous>, transform_indices = @transform_2, window_bounds = array<i64: 32, 128>}, {pipeline_mode = #tpu.pipeline_mode<synchronous>, transform_indices = @transform_3, window_bounds = array<i64: 8, 32>}, {transform_indices = @transform_4, window_bounds = array<i64: 8, 1024>}]} {
    %c0 = arith.constant 0 : index
    %c0_0 = arith.constant 0 : index
    %0 = vector.load %arg2[%c0, %c0_0] : memref<32x32xf32, #tpu.memory_space<vmem>>, vector<32x32xf32>
    %c0_1 = arith.constant 0 : index
    %c0_2 = arith.constant 0 : index
    %1 = vector.load %arg4[%c0_1, %c0_2] : memref<8x32xf32, #tpu.memory_space<vmem>>, vector<8x32xf32>
    %c0_3 = arith.constant 0 : index
    %c0_4 = arith.constant 0 : index
    %2 = vector.load %arg3[%c0_3, %c0_4] : memref<32x128xf32, #tpu.memory_space<vmem>>, vector<32x128xf32>
    %3 = vector.extract_strided_slice %2 {offsets = [0, 0], sizes = [32, 1], strides = [1, 1]} : vector<32x128xf32> to vector<32x1xf32>
    %4 = tpu.iota {dimensions = array<i32: 1>} : vector<8x1024xi32>
    %c16_i32 = arith.constant 16 : i32
    %c0_i32 = arith.constant 0 : i32
    %5 = arith.cmpi eq, %c16_i32, %c0_i32 : i32
    %c1_i32 = arith.constant 1 : i32
    %6 = arith.select %5, %c1_i32, %c16_i32 : i32
    %7 = vector.broadcast %6 : i32 to vector<8x1024xi32>
    %8 = arith.remsi %4, %7 : vector<8x1024xi32>
    %c0_i32_5 = arith.constant 0 : i32
    %9 = vector.broadcast %c0_i32_5 : i32 to vector<8x1024xi32>
    %10 = arith.cmpi ne, %8, %9 : vector<8x1024xi32>
    %c0_i32_6 = arith.constant 0 : i32
    %11 = vector.broadcast %c0_i32_6 : i32 to vector<8x1024xi32>
    %12 = arith.cmpi slt, %8, %11 : vector<8x1024xi32>
    %c0_i32_7 = arith.constant 0 : i32
    %13 = arith.cmpi slt, %6, %c0_i32_7 : i32
    %14 = vector.broadcast %13 : i1 to vector<8x1024xi1>
    %15 = vector.broadcast %14 : vector<8x1024xi1> to vector<8x1024xi1>
    %16 = arith.xori %12, %15 : vector<8x1024xi1>
    %17 = arith.andi %16, %10 : vector<8x1024xi1>
    %18 = vector.broadcast %6 : i32 to vector<8x1024xi32>
    %19 = arith.addi %8, %18 : vector<8x1024xi32>
    %20 = arith.select %17, %19, %8 : vector<8x1024xi1>, vector<8x1024xi32>
    %c15_i32 = arith.constant 15 : i32
    %21 = vector.broadcast %c15_i32 : i32 to vector<8x1024xi32>
    %22 = arith.cmpi eq, %20, %21 : vector<8x1024xi32>
    %c0_i32_8 = arith.constant 0 : i32
    %23 = vector.broadcast %c0_i32_8 : i32 to vector<8x1024xi32>
    %24 = arith.cmpi eq, %20, %23 : vector<8x1024xi32>
    %c256_i32 = arith.constant 256 : i32
    %c0_i32_9 = arith.constant 0 : i32
    %25 = arith.cmpi eq, %c256_i32, %c0_i32_9 : i32
    %c1_i32_10 = arith.constant 1 : i32
    %26 = arith.select %25, %c1_i32_10, %c256_i32 : i32
    %27 = vector.broadcast %26 : i32 to vector<8x1024xi32>
    %28 = arith.remsi %4, %27 : vector<8x1024xi32>
    %c0_i32_11 = arith.constant 0 : i32
    %29 = vector.broadcast %c0_i32_11 : i32 to vector<8x1024xi32>
    %30 = arith.cmpi ne, %28, %29 : vector<8x1024xi32>
    %c0_i32_12 = arith.constant 0 : i32
    %31 = vector.broadcast %c0_i32_12 : i32 to vector<8x1024xi32>
    %32 = arith.cmpi slt, %28, %31 : vector<8x1024xi32>
    %c0_i32_13 = arith.constant 0 : i32
    %33 = arith.cmpi slt, %26, %c0_i32_13 : i32
    %34 = vector.broadcast %33 : i1 to vector<8x1024xi1>
    %35 = vector.broadcast %34 : vector<8x1024xi1> to vector<8x1024xi1>
    %36 = arith.xori %32, %35 : vector<8x1024xi1>
    %37 = arith.andi %36, %30 : vector<8x1024xi1>
    %38 = vector.broadcast %26 : i32 to vector<8x1024xi32>
    %39 = arith.addi %28, %38 : vector<8x1024xi32>
    %40 = arith.select %37, %39, %28 : vector<8x1024xi1>, vector<8x1024xi32>
    %c16_i32_14 = arith.constant 16 : i32
    %41 = vector.broadcast %c16_i32_14 : i32 to vector<8x1024xi32>
    %42 = arith.cmpi slt, %40, %41 : vector<8x1024xi32>
    %c240_i32 = arith.constant 240 : i32
    %43 = vector.broadcast %c240_i32 : i32 to vector<8x1024xi32>
    %44 = arith.cmpi sge, %40, %43 : vector<8x1024xi32>
    %c0_15 = arith.constant 0 : index
    %c0_16 = arith.constant 0 : index
    %45 = vector.load %arg1[%c0_15, %c0_16] : memref<8x1024xf32, #tpu.memory_space<vmem>>, vector<8x1024xf32>
    %c15_i32_17 = arith.constant 15 : i32
    %46 = tpu.dynamic_rotate %45 by %c15_i32_17 dim 1 : vector<8x1024xf32>, i32 -> vector<8x1024xf32>
    %c1023_i32 = arith.constant 1023 : i32
    %47 = tpu.dynamic_rotate %45 by %c1023_i32 dim 1 : vector<8x1024xf32>, i32 -> vector<8x1024xf32>
    %48 = arith.select %22, %46, %47 : vector<8x1024xi1>, vector<8x1024xf32>
    %c1009_i32 = arith.constant 1009 : i32
    %49 = tpu.dynamic_rotate %45 by %c1009_i32 dim 1 : vector<8x1024xf32>, i32 -> vector<8x1024xf32>
    %c1_i32_18 = arith.constant 1 : i32
    %50 = tpu.dynamic_rotate %45 by %c1_i32_18 dim 1 : vector<8x1024xf32>, i32 -> vector<8x1024xf32>
    %51 = arith.select %24, %49, %50 : vector<8x1024xi1>, vector<8x1024xf32>
    %52 = arith.subf %48, %51 : vector<8x1024xf32>
    %cst = arith.constant 2.000000e+00 : f32
    %53 = vector.broadcast %cst : f32 to vector<8x1024xf32>
    %54 = arith.mulf %53, %45 : vector<8x1024xf32>
    %55 = arith.addf %51, %54 : vector<8x1024xf32>
    %56 = arith.addf %55, %48 : vector<8x1024xf32>
    %c16_i32_19 = arith.constant 16 : i32
    %57 = tpu.dynamic_rotate %52 by %c16_i32_19 dim 1 : vector<8x1024xf32>, i32 -> vector<8x1024xf32>
    %c784_i32 = arith.constant 784 : i32
    %58 = tpu.dynamic_rotate %52 by %c784_i32 dim 1 : vector<8x1024xf32>, i32 -> vector<8x1024xf32>
    %59 = arith.select %42, %58, %57 : vector<8x1024xi1>, vector<8x1024xf32>
    %c1008_i32 = arith.constant 1008 : i32
    %60 = tpu.dynamic_rotate %52 by %c1008_i32 dim 1 : vector<8x1024xf32>, i32 -> vector<8x1024xf32>
    %c240_i32_20 = arith.constant 240 : i32
    %61 = tpu.dynamic_rotate %52 by %c240_i32_20 dim 1 : vector<8x1024xf32>, i32 -> vector<8x1024xf32>
    %62 = arith.select %44, %61, %60 : vector<8x1024xi1>, vector<8x1024xf32>
    %63 = arith.addf %59, %62 : vector<8x1024xf32>
    %cst_21 = arith.constant 2.000000e+00 : f32
    %64 = vector.broadcast %cst_21 : f32 to vector<8x1024xf32>
    %65 = arith.mulf %64, %52 : vector<8x1024xf32>
    %66 = arith.addf %63, %65 : vector<8x1024xf32>
    %cst_22 = arith.constant 1.250000e-01 : f32
    %67 = vector.broadcast %cst_22 : f32 to vector<8x1024xf32>
    %68 = arith.mulf %66, %67 : vector<8x1024xf32>
    %c16_i32_23 = arith.constant 16 : i32
    %69 = tpu.dynamic_rotate %56 by %c16_i32_23 dim 1 : vector<8x1024xf32>, i32 -> vector<8x1024xf32>
    %c784_i32_24 = arith.constant 784 : i32
    %70 = tpu.dynamic_rotate %56 by %c784_i32_24 dim 1 : vector<8x1024xf32>, i32 -> vector<8x1024xf32>
    %71 = arith.select %42, %70, %69 : vector<8x1024xi1>, vector<8x1024xf32>
    %c1008_i32_25 = arith.constant 1008 : i32
    %72 = tpu.dynamic_rotate %56 by %c1008_i32_25 dim 1 : vector<8x1024xf32>, i32 -> vector<8x1024xf32>
    %c240_i32_26 = arith.constant 240 : i32
    %73 = tpu.dynamic_rotate %56 by %c240_i32_26 dim 1 : vector<8x1024xf32>, i32 -> vector<8x1024xf32>
    %74 = arith.select %44, %73, %72 : vector<8x1024xi1>, vector<8x1024xf32>
    %75 = arith.subf %74, %71 : vector<8x1024xf32>
    %cst_27 = arith.constant 1.250000e-01 : f32
    %76 = vector.broadcast %cst_27 : f32 to vector<8x1024xf32>
    %77 = arith.mulf %75, %76 : vector<8x1024xf32>
    %78 = arith.addf %71, %74 : vector<8x1024xf32>
    %cst_28 = arith.constant 2.000000e+00 : f32
    %79 = vector.broadcast %cst_28 : f32 to vector<8x1024xf32>
    %80 = arith.mulf %79, %56 : vector<8x1024xf32>
    %81 = arith.addf %78, %80 : vector<8x1024xf32>
    %cst_29 = arith.constant 1.600000e+01 : f32
    %82 = vector.broadcast %cst_29 : f32 to vector<8x1024xf32>
    %83 = arith.mulf %82, %45 : vector<8x1024xf32>
    %84 = arith.subf %81, %83 : vector<8x1024xf32>
    %cst_30 = arith.constant 6.250000e-02 : f32
    %85 = vector.broadcast %cst_30 : f32 to vector<8x1024xf32>
    %86 = arith.mulf %84, %85 : vector<8x1024xf32>
    %87 = tpu.concatenate %45, %68, %77, %86 in 0 : vector<8x1024xf32>, vector<8x1024xf32>, vector<8x1024xf32>, vector<8x1024xf32> -> vector<32x1024xf32>
    %cst_31 = arith.constant dense<0.000000e+00> : vector<32x1024xf32>
    %88 = tpu.matmul %0, %87, %cst_31 {dimension_numbers = #tpu.dot_dimension_numbers<[1], [0], [0], [1], [0, 0, 1, 1], [], []>} : vector<32x32xf32>, vector<32x1024xf32>, vector<32x1024xf32> -> vector<32x1024xf32>
    %89 = vector.broadcast %3 : vector<32x1xf32> to vector<32x1024xf32>
    %90 = arith.addf %88, %89 : vector<32x1024xf32>
    %cst_32 = arith.constant 0.000000e+00 : f32
    %91 = vector.broadcast %cst_32 : f32 to vector<32x1024xf32>
    %92 = arith.maximumf %90, %91 : vector<32x1024xf32>
    %cst_33 = arith.constant dense<0.000000e+00> : vector<8x1024xf32>
    %93 = tpu.matmul %1, %92, %cst_33 {dimension_numbers = #tpu.dot_dimension_numbers<[1], [0], [0], [1], [0, 0, 1, 1], [], []>} : vector<8x32xf32>, vector<32x1024xf32>, vector<8x1024xf32> -> vector<8x1024xf32>
    %94 = arith.addf %45, %93 : vector<8x1024xf32>
    %c0_34 = arith.constant 0 : index
    %c0_35 = arith.constant 0 : index
    %95 = vector.load %arg5[%c0_34, %c0_35] : memref<8x1024xf32, #tpu.memory_space<vmem>>, vector<8x1024xf32>
    tpu.vector_store %arg5[%c0_34, %c0_35], %94 {strides = array<i32>} : memref<8x1024xf32, #tpu.memory_space<vmem>>, vector<8x1024xf32>,
    return
  }
  func.func @transform_0(%arg0: i32) -> (i32, i32) {
    %c0_i32 = arith.constant 0 : i32
    %c0_i32_0 = arith.constant 0 : i32
    return %c0_i32, %arg0 : i32, i32
  }
  func.func @transform_1(%arg0: i32) -> (i32, i32) {
    %c0_i32 = arith.constant 0 : i32
    %c0_i32_0 = arith.constant 0 : i32
    %c0_i32_1 = arith.constant 0 : i32
    return %c0_i32, %c0_i32_0 : i32, i32
  }
  func.func @transform_2(%arg0: i32) -> (i32, i32) {
    %c0_i32 = arith.constant 0 : i32
    %c0_i32_0 = arith.constant 0 : i32
    %c0_i32_1 = arith.constant 0 : i32
    return %c0_i32, %c0_i32_0 : i32, i32
  }
  func.func @transform_3(%arg0: i32) -> (i32, i32) {
    %c0_i32 = arith.constant 0 : i32
    %c0_i32_0 = arith.constant 0 : i32
    %c0_i32_1 = arith.constant 0 : i32
    return %c0_i32, %c0_i32_0 : i32, i32
  }
  func.func @transform_4(%arg0: i32) -> (i32, i32) {
    %c0_i32 = arith.constant 0 : i32
    %c0_i32_0 = arith.constant 0 : i32
    return %c0_i32, %arg0 : i32, i32
  }
}

</mosaic_0001>

<llo_original>
// kernel: nca_forward.1
$region0: #{nca_forward.1}
  #allocation0 [shape = 'u32[]', space=smem, size = 0x4, offset = 0x4, fixed_abs, tag = 'smem constant byte address 0x4 - core index']
  #allocation1 [shape = 'u32[144,128]{1,0:T(1,128)}', space=vmem, size = 0x12000, scoped, tag = 'internal scratch']
  %s0 = inlined_call_operand.vmem [shape: f32[8,2048], index: 0, kind: input, shape index: {}]
  %s1 = inlined_call_operand.vmem [shape: f32[32,32], index: 1, kind: input, shape index: {}]
  %s2 = inlined_call_operand.vmem [shape: f32[32,128], index: 2, kind: input, shape index: {}]
  %s3 = inlined_call_operand.vmem [shape: f32[8,32], index: 3, kind: input, shape index: {}]
  %s4 = inlined_call_operand.vmem [shape: f32[8,2048], index: 4, kind: output, shape index: {}]
  %s5 = sld [smem:[#allocation0]]
  $region49: #{nca_forward.1} parent=0
    _
  %s7 = ssub.s32 1, %s5
  %s8 = scalar_select 0, %s7, %s5
  loop: start=0, step=1, limit=4
  $region2: #{nca_forward.1} parent=0 // loop_pre_header
    _
  $region3: #{nca_forward.1} parent=0 // loop_header
    %s10 = sphi 0, %s14
    %p11 = scmp.ge.s32.totalorder %s10, 4
    %s20 = sphi 0, %s22
    %s23 = sphi 0, %s20
    %s24 = sphi 0, %s23
    %s40 = sphi 0, %s24
    %s44 = sphi 0, %s44
    %s46 = sphi 0, %s44
    %s47 = sphi 0, %s46
    %s61 = sphi 0, %s47
    %s65 = sphi 0, %s65
    %s67 = sphi 0, %s65
    %s68 = sphi 0, %s67
    %s82 = sphi 0, %s68
    %s86 = sphi 0, %s86
    %s88 = sphi 0, %s86
    %s89 = sphi 0, %s88
    %s103 = sphi 0, %s89
    %s109 = sphi 0, %s111
    %s112 = sphi 0, %s109
    %s113 = sphi 0, %s112
    %s129 = sphi 0, %s113
  $region4: #{nca_forward.1} parent=0 // loop_header_branch
    %13 = sbr.rel (%p11) target = $region8
  $region5: #{nca_forward.1} parent=0 // loop_body
    %s15 = ssub.s32 %s10, 1
    %s16 = ssub.s32 %s10, 2
    %s17 = sadd.s32 %s10, 1
    %s18 = ssub.s32 %s10, %s17
    %p19 = scmp.eq.s32.totalorder %s18, 0
    %s21 = sadd.s32 %s20, 1
    %s22 = scalar_select %p19, %s20, %s21
    %p25 = pneg %p19
    %p26 = scmp.eq.s32.totalorder %s10, 1
    %p27 = por %p25, %p26
    %p28 = scmp.ne.s32.totalorder %s20, %s23
    %p29 = scmp.eq.s32.totalorder %s10, 0
    %p30 = por %p28, %p29
    %p31 = scmp.ne.s32.totalorder %s20, %s23
    %p32 = scmp.eq.s32.totalorder %s15, 1
    %p33 = por %p31, %p32
    %p34 = scmp.ne.s32.totalorder %s23, %s24
    %p35 = scmp.eq.s32.totalorder %s15, 0
    %p36 = por %p34, %p35
    %p37 = scmp.ne.s32.totalorder %s23, %s24
    %p38 = scmp.eq.s32.totalorder %s16, 1
    %p39 = por %p37, %p38
    %p41 = scmp.ne.s32.totalorder %s24, %s40
    %p42 = scmp.eq.s32.totalorder %s16, 0
    %p43 = por %p41, %p42
    %s45 = sadd.s32 %s44, 1
    %p48 = scmp.eq.s32.totalorder %s10, 1
    %p49 = scmp.ne.s32.totalorder %s44, %s46
    %p50 = scmp.eq.s32.totalorder %s10, 0
    %p51 = por %p49, %p50
    %p52 = scmp.ne.s32.totalorder %s44, %s46
    %p53 = scmp.eq.s32.totalorder %s15, 1
    %p54 = por %p52, %p53
    %p55 = scmp.ne.s32.totalorder %s46, %s47
    %p56 = scmp.eq.s32.totalorder %s15, 0
    %p57 = por %p55, %p56
    %p58 = scmp.ne.s32.totalorder %s46, %s47
    %p59 = scmp.eq.s32.totalorder %s16, 1
    %p60 = por %p58, %p59
    %p62 = scmp.ne.s32.totalorder %s47, %s61
    %p63 = scmp.eq.s32.totalorder %s16, 0
    %p64 = por %p62, %p63
    %s66 = sadd.s32 %s65, 1
    %p69 = scmp.eq.s32.totalorder %s10, 1
    %p70 = scmp.ne.s32.totalorder %s65, %s67
    %p71 = scmp.eq.s32.totalorder %s10, 0
    %p72 = por %p70, %p71
    %p73 = scmp.ne.s32.totalorder %s65, %s67
    %p74 = scmp.eq.s32.totalorder %s15, 1
    %p75 = por %p73, %p74
    %p76 = scmp.ne.s32.totalorder %s67, %s68
    %p77 = scmp.eq.s32.totalorder %s15, 0
    %p78 = por %p76, %p77
    %p79 = scmp.ne.s32.totalorder %s67, %s68
    %p80 = scmp.eq.s32.totalorder %s16, 1
    %p81 = por %p79, %p80
    %p83 = scmp.ne.s32.totalorder %s68, %s82
    %p84 = scmp.eq.s32.totalorder %s16, 0
    %p85 = por %p83, %p84
    %s87 = sadd.s32 %s86, 1
    %p90 = scmp.eq.s32.totalorder %s10, 1
    %p91 = scmp.ne.s32.totalorder %s86, %s88
    %p92 = scmp.eq.s32.totalorder %s10, 0
    %p93 = por %p91, %p92
    %p94 = scmp.ne.s32.totalorder %s86, %s88
    %p95 = scmp.eq.s32.totalorder %s15, 1
    %p96 = por %p94, %p95
    %p97 = scmp.ne.s32.totalorder %s88, %s89
    %p98 = scmp.eq.s32.totalorder %s15, 0
    %p99 = por %p97, %p98
    %p100 = scmp.ne.s32.totalorder %s88, %s89
    %p101 = scmp.eq.s32.totalorder %s16, 1
    %p102 = por %p100, %p101
    %p104 = scmp.ne.s32.totalorder %s89, %s103
    %p105 = scmp.eq.s32.totalorder %s16, 0
    %p106 = por %p104, %p105
    %s107 = ssub.s32 %s10, %s17
    %p108 = scmp.eq.s32.totalorder %s107, 0
    %s110 = sadd.s32 %s109, 1
    %s111 = scalar_select %p108, %s109, %s110
    %p114 = pneg %p108
    %p115 = scmp.eq.s32.totalorder %s10, 1
    %p116 = por %p114, %p115
    %p117 = scmp.ne.s32.totalorder %s109, %s112
    %p118 = scmp.eq.s32.totalorder %s10, 0
    %p119 = por %p117, %p118
    %p120 = scmp.ne.s32.totalorder %s109, %s112
    %p121 = scmp.eq.s32.totalorder %s15, 1
    %p122 = por %p120, %p121
    %p123 = scmp.ne.s32.totalorder %s112, %s113
    %p124 = scmp.eq.s32.totalorder %s15, 0
    %p125 = por %p123, %p124
    %p126 = scmp.ne.s32.totalorder %s112, %s113
    %p127 = scmp.eq.s32.totalorder %s16, 1
    %p128 = por %p126, %p127
    %p130 = scmp.ne.s32.totalorder %s113, %s129
    %p131 = scmp.eq.s32.totalorder %s16, 0
    %p132 = por %p130, %p131
    %p133 = scmp.le.s32.totalorder 1, %s10
    %p134 = scmp.lt.s32.totalorder %s10, 3
    %p135 = pnand %p133, %p134
    %p136 = pneg %p135
    // Predicated region
    $region9: #{nca_forward.1} parent=5 // pred_check
      _
    $region10: #{nca_forward.1} parent=5 // pred_check_branch
      %138 = sbr.rel (%p135) target = $region12
    $region11: #{nca_forward.1} parent=5 // pred_region
      %s139 = ssub.s32 %s10, 1
      // Predicated region
      $region13: #{nca_forward.1} parent=11 // pred_check
        %p140 = pneg %p57
      $region14: #{nca_forward.1} parent=11 // pred_check_branch
        %142 = sbr.rel (%p140) target = $region16
      $region15: #{nca_forward.1} parent=11 // pred_region
        _
      $region16: #{nca_forward.1} parent=11 // pred_fallthru
        _
      // Predicated region
      $region17: #{nca_forward.1} parent=11 // pred_check
        %p143 = pneg %p78
      $region18: #{nca_forward.1} parent=11 // pred_check_branch
        %145 = sbr.rel (%p143) target = $region20
      $region19: #{nca_forward.1} parent=11 // pred_region
        _
      $region20: #{nca_forward.1} parent=11 // pred_fallthru
        _
      // Predicated region
      $region21: #{nca_forward.1} parent=11 // pred_check
        %p146 = pneg %p99
      $region22: #{nca_forward.1} parent=11 // pred_check_branch
        %148 = sbr.rel (%p146) target = $region24
      $region23: #{nca_forward.1} parent=11 // pred_region
        _
      $region24: #{nca_forward.1} parent=11 // pred_fallthru
        _
    $region12: #{nca_forward.1} parent=5 // pred_fallthru
      _
    %p149 = scmp.lt.s32.totalorder %s10, 2
    // Predicated region
    $region25: #{nca_forward.1} parent=5 // pred_check
      %p150 = pneg %p149
    $region26: #{nca_forward.1} parent=5 // pred_check_branch
      %152 = sbr.rel (%p150) target = $region28
    $region27: #{nca_forward.1} parent=5 // pred_region
      // Predicated region
      $region29: #{nca_forward.1} parent=27 // pred_check
        %p153 = pneg %p30
      $region30: #{nca_forward.1} parent=27 // pred_check_branch
        %155 = sbr.rel (%p153) target = $region32
      $region31: #{nca_forward.1} parent=27 // pred_region
        %s156 = smul.u32 8, %s10
        %p157 = scmp.lt.s32.totalorder %s156, 15
        %s158 = scalar_select %p157, %s156, 15
        %s159 = smul.addr %s158, 8
        %s160 = scalar_lea.vmem %s0, %s159
        %s161 = smul.u32 8, %s10
      $region32: #{nca_forward.1} parent=27 // pred_fallthru
        _
    $region28: #{nca_forward.1} parent=5 // pred_fallthru
      _
    %p162 = scmp.le.s32.totalorder 1, %s10
    %p163 = scmp.lt.s32.totalorder %s10, 3
    %p164 = pnand %p162, %p163
    %p165 = pneg %p164
    // Predicated region
    $region33: #{nca_forward.1} parent=5 // pred_check
      _
    $region34: #{nca_forward.1} parent=5 // pred_check_branch
      %167 = sbr.rel (%p164) target = $region36
    $region35: #{nca_forward.1} parent=5 // pred_region
      %s168 = ssub.s32 %s10, 1
      %s169 = smul.u32 8, %s15
      %p170 = scmp.lt.s32.totalorder %s169, 15
      %s171 = scalar_select %p170, %s169, 15
      %s172 = smul.addr %s171, 8
      %s173 = scalar_lea.vmem %s0, %s172
      %p174 = pneg %p36
      %p175 = pneg %p33
      %p176 = pneg %p57
      %p177 = pneg %p54
      %p178 = pneg %p78
      %p179 = pneg %p75
      %p180 = pneg %p99
      %p181 = pneg %p96
      %p182 = pneg %p125
      %p183 = pneg %p122
      %s184 = smul.u32 8, %s15
      %p185 = scmp.lt.s32.totalorder %s184, 15
      %s186 = scalar_select %p185, %s184, 15
      %s187 = smul.addr %s186, 8
      %s188 = scalar_lea.vmem %s4, %s187
      %s189 = smul.u32 8, %s15
      %p190 = scmp.lt.s32.totalorder %s189, 15
      %s191 = scalar_select %p190, %s189, 15
      %s192 = smul.addr %s191, 8
      %s193 = scalar_lea.vmem %s0, %s192
      %s194 = smul.u32 8, %s15
      %s195 = smul.u32 8, %s15
      %p196 = scmp.lt.s32.totalorder %s195, 15
      %s197 = scalar_select %p196, %s195, 15
      %s198 = smul.addr %s197, 8
      %s199 = scalar_lea.vmem %s4, %s198
      %s200 = smul.u32 8, %s15
      %v201 = vld [vmem:[%s1] sm:$0xff]
      %v202 = vld [vmem:[%s1 + $0x8] sm:$0xff]
      %v203 = vld [vmem:[%s1 + $0x10] sm:$0xff]
      %v204 = vld [vmem:[%s1 + $0x18] sm:$0xff]
      %v205 = vld [vmem:[%s3] sm:$0xff]
      %v206 = vld [vmem:[%s2] sm:$0xff]
      %v207 = vld [vmem:[%s2 + $0x8] sm:$0xff]
      %v208 = vld [vmem:[%s2 + $0x10] sm:$0xff]
      %v209 = vld [vmem:[%s2 + $0x18] sm:$0xff]
      %v210 = vlaneseq
      %v211 = vand.u32 %v210, 127
      %v212 = vadd.s32 %v211, 128
      %v213 = vadd.s32 %v211, 256
      %v214 = vadd.s32 %v211, 384
      %v215 = vadd.s32 %v211, 512
      %v216 = vadd.s32 %v211, 640
      %v217 = vadd.s32 %v211, 768
      %v218 = vadd.s32 %v211, 896
      %vm219 = vcmp.lt.s32.totalorder %v211, 0
      %v220 = vsub.s32 0, %v211
      %v221 = vsel %vm219, %v220, %v211
      %v222 = vshrl.u32 %v221, 4
      %v223 = vand.u32 %v221, 15
      %v224 = vsub.s32 0, %v223
      %v225 = vsel %vm219, %v224, %v223
      %vm226 = vcmp.lt.s32.totalorder %v212, 0
      %v227 = vsub.s32 0, %v212
      %v228 = vsel %vm226, %v227, %v212
      %v229 = vshrl.u32 %v228, 4
      %v230 = vand.u32 %v228, 15
      %v231 = vsub.s32 0, %v230
      %v232 = vsel %vm226, %v231, %v230
      %vm233 = vcmp.lt.s32.totalorder %v213, 0
      %v234 = vsub.s32 0, %v213
      %v235 = vsel %vm233, %v234, %v213
      %v236 = vshrl.u32 %v235, 4
      %v237 = vand.u32 %v235, 15
      %v238 = vsub.s32 0, %v237
      %v239 = vsel %vm233, %v238, %v237
      %vm240 = vcmp.lt.s32.totalorder %v214, 0
      %v241 = vsub.s32 0, %v214
      %v242 = vsel %vm240, %v241, %v214
      %v243 = vshrl.u32 %v242, 4
      %v244 = vand.u32 %v242, 15
      %v245 = vsub.s32 0, %v244
      %v246 = vsel %vm240, %v245, %v244
      %vm247 = vcmp.lt.s32.totalorder %v215, 0
      %v248 = vsub.s32 0, %v215
      %v249 = vsel %vm247, %v248, %v215
      %v250 = vshrl.u32 %v249, 4
      %v251 = vand.u32 %v249, 15
      %v252 = vsub.s32 0, %v251
      %v253 = vsel %vm247, %v252, %v251
      %vm254 = vcmp.lt.s32.totalorder %v216, 0
      %v255 = vsub.s32 0, %v216
      %v256 = vsel %vm254, %v255, %v216
      %v257 = vshrl.u32 %v256, 4
      %v258 = vand.u32 %v256, 15
      %v259 = vsub.s32 0, %v258
      %v260 = vsel %vm254, %v259, %v258
      %vm261 = vcmp.lt.s32.totalorder %v217, 0
      %v262 = vsub.s32 0, %v217
      %v263 = vsel %vm261, %v262, %v217
      %v264 = vshrl.u32 %v263, 4
      %v265 = vand.u32 %v263, 15
      %v266 = vsub.s32 0, %v265
      %v267 = vsel %vm261, %v266, %v265
      %vm268 = vcmp.lt.s32.totalorder %v218, 0
      %v269 = vsub.s32 0, %v218
      %v270 = vsel %vm268, %v269, %v218
      %v271 = vshrl.u32 %v270, 4
      %v272 = vand.u32 %v270, 15
      %v273 = vsub.s32 0, %v272
      %v274 = vsel %vm268, %v273, %v272
      %vm275 = vcmp.ne.s32.totalorder %v225, 0
      %vm276 = vcmp.ne.s32.totalorder %v232, 0
      %vm277 = vcmp.ne.s32.totalorder %v239, 0
      %vm278 = vcmp.ne.s32.totalorder %v246, 0
      %vm279 = vcmp.ne.s32.totalorder %v253, 0
      %vm280 = vcmp.ne.s32.totalorder %v260, 0
      %vm281 = vcmp.ne.s32.totalorder %v267, 0
      %vm282 = vcmp.ne.s32.totalorder %v274, 0
      %vm283 = vcmp.lt.s32.totalorder %v225, 0
      %vm284 = vcmp.lt.s32.totalorder %v232, 0
      %vm285 = vcmp.lt.s32.totalorder %v239, 0
      %vm286 = vcmp.lt.s32.totalorder %v246, 0
      %vm287 = vcmp.lt.s32.totalorder %v253, 0
      %vm288 = vcmp.lt.s32.totalorder %v260, 0
      %vm289 = vcmp.lt.s32.totalorder %v267, 0
      %vm290 = vcmp.lt.s32.totalorder %v274, 0
      %vm291 = vmand %vm283, %vm275
      %vm292 = vmand %vm284, %vm276
      %vm293 = vmand %vm285, %vm277
      %vm294 = vmand %vm286, %vm278
      %vm295 = vmand %vm287, %vm279
      %vm296 = vmand %vm288, %vm280
      %vm297 = vmand %vm289, %vm281
      %vm298 = vmand %vm290, %vm282
      %v299 = vadd.s32 %v225, 16
      %v300 = vadd.s32 %v232, 16
      %v301 = vadd.s32 %v239, 16
      %v302 = vadd.s32 %v246, 16
      %v303 = vadd.s32 %v253, 16
      %v304 = vadd.s32 %v260, 16
      %v305 = vadd.s32 %v267, 16
      %v306 = vadd.s32 %v274, 16
      %v307 = vsel %vm291, %v299, %v225
      %v308 = vsel %vm292, %v300, %v232
      %v309 = vsel %vm293, %v301, %v239
      %v310 = vsel %vm294, %v302, %v246
      %v311 = vsel %vm295, %v303, %v253
      %v312 = vsel %vm296, %v304, %v260
      %v313 = vsel %vm297, %v305, %v267
      %v314 = vsel %vm298, %v306, %v274
      %vm315 = vcmp.eq.s32.totalorder %v307, 15
      %vm316 = vcmp.eq.s32.totalorder %v308, 15
      %vm317 = vcmp.eq.s32.totalorder %v309, 15
      %vm318 = vcmp.eq.s32.totalorder %v310, 15
      %vm319 = vcmp.eq.s32.totalorder %v311, 15
      %vm320 = vcmp.eq.s32.totalorder %v312, 15
      %vm321 = vcmp.eq.s32.totalorder %v313, 15
      %vm322 = vcmp.eq.s32.totalorder %v314, 15
      %vm323 = vcmp.eq.s32.totalorder %v307, 0
      %vm324 = vcmp.eq.s32.totalorder %v308, 0
      %vm325 = vcmp.eq.s32.totalorder %v309, 0
      %vm326 = vcmp.eq.s32.totalorder %v310, 0
      %vm327 = vcmp.eq.s32.totalorder %v311, 0
      %vm328 = vcmp.eq.s32.totalorder %v312, 0
      %vm329 = vcmp.eq.s32.totalorder %v313, 0
      %vm330 = vcmp.eq.s32.totalorder %v314, 0
      %vm331 = vcmp.lt.s32.totalorder %v211, 0
      %v332 = vsub.s32 0, %v211
      %v333 = vsel %vm331, %v332, %v211
      %v334 = vshrl.u32 %v333, 8
      %v335 = vand.u32 %v333, 255
      %v336 = vsub.s32 0, %v335
      %v337 = vsel %vm331, %v336, %v335
      %vm338 = vcmp.lt.s32.totalorder %v212, 0
      %v339 = vsub.s32 0, %v212
      %v340 = vsel %vm338, %v339, %v212
      %v341 = vshrl.u32 %v340, 8
      %v342 = vand.u32 %v340, 255
      %v343 = vsub.s32 0, %v342
      %v344 = vsel %vm338, %v343, %v342
      %vm345 = vcmp.lt.s32.totalorder %v213, 0
      %v346 = vsub.s32 0, %v213
      %v347 = vsel %vm345, %v346, %v213
      %v348 = vshrl.u32 %v347, 8
      %v349 = vand.u32 %v347, 255
      %v350 = vsub.s32 0, %v349
      %v351 = vsel %vm345, %v350, %v349
      %vm352 = vcmp.lt.s32.totalorder %v214, 0
      %v353 = vsub.s32 0, %v214
      %v354 = vsel %vm352, %v353, %v214
      %v355 = vshrl.u32 %v354, 8
      %v356 = vand.u32 %v354, 255
      %v357 = vsub.s32 0, %v356
      %v358 = vsel %vm352, %v357, %v356
      %vm359 = vcmp.lt.s32.totalorder %v215, 0
      %v360 = vsub.s32 0, %v215
      %v361 = vsel %vm359, %v360, %v215
      %v362 = vshrl.u32 %v361, 8
      %v363 = vand.u32 %v361, 255
      %v364 = vsub.s32 0, %v363
      %v365 = vsel %vm359, %v364, %v363
      %vm366 = vcmp.lt.s32.totalorder %v216, 0
      %v367 = vsub.s32 0, %v216
      %v368 = vsel %vm366, %v367, %v216
      %v369 = vshrl.u32 %v368, 8
      %v370 = vand.u32 %v368, 255
      %v371 = vsub.s32 0, %v370
      %v372 = vsel %vm366, %v371, %v370
      %vm373 = vcmp.lt.s32.totalorder %v217, 0
      %v374 = vsub.s32 0, %v217
      %v375 = vsel %vm373, %v374, %v217
      %v376 = vshrl.u32 %v375, 8
      %v377 = vand.u32 %v375, 255
      %v378 = vsub.s32 0, %v377
      %v379 = vsel %vm373, %v378, %v377
      %vm380 = vcmp.lt.s32.totalorder %v218, 0
      %v381 = vsub.s32 0, %v218
      %v382 = vsel %vm380, %v381, %v218
      %v383 = vshrl.u32 %v382, 8
      %v384 = vand.u32 %v382, 255
      %v385 = vsub.s32 0, %v384
      %v386 = vsel %vm380, %v385, %v384
      %vm387 = vcmp.ne.s32.totalorder %v337, 0
      %vm388 = vcmp.ne.s32.totalorder %v344, 0
      %vm389 = vcmp.ne.s32.totalorder %v351, 0
      %vm390 = vcmp.ne.s32.totalorder %v358, 0
      %vm391 = vcmp.ne.s32.totalorder %v365, 0
      %vm392 = vcmp.ne.s32.totalorder %v372, 0
      %vm393 = vcmp.ne.s32.totalorder %v379, 0
      %vm394 = vcmp.ne.s32.totalorder %v386, 0
      %vm395 = vcmp.lt.s32.totalorder %v337, 0
      %vm396 = vcmp.lt.s32.totalorder %v344, 0
      %vm397 = vcmp.lt.s32.totalorder %v351, 0
      %vm398 = vcmp.lt.s32.totalorder %v358, 0
      %vm399 = vcmp.lt.s32.totalorder %v365, 0
      %vm400 = vcmp.lt.s32.totalorder %v372, 0
      %vm401 = vcmp.lt.s32.totalorder %v379, 0
      %vm402 = vcmp.lt.s32.totalorder %v386, 0
      %vm403 = vmand %vm395, %vm387
      %vm404 = vmand %vm396, %vm388
      %vm405 = vmand %vm397, %vm389
      %vm406 = vmand %vm398, %vm390
      %vm407 = vmand %vm399, %vm391
      %vm408 = vmand %vm400, %vm392
      %vm409 = vmand %vm401, %vm393
      %vm410 = vmand %vm402, %vm394
      %v411 = vadd.s32 %v337, 256
      %v412 = vadd.s32 %v344, 256
      %v413 = vadd.s32 %v351, 256
      %v414 = vadd.s32 %v358, 256
      %v415 = vadd.s32 %v365, 256
      %v416 = vadd.s32 %v372, 256
      %v417 = vadd.s32 %v379, 256
      %v418 = vadd.s32 %v386, 256
      %v419 = vsel %vm403, %v411, %v337
      %v420 = vsel %vm404, %v412, %v344
      %v421 = vsel %vm405, %v413, %v351
      %v422 = vsel %vm406, %v414, %v358
      %v423 = vsel %vm407, %v415, %v365
      %v424 = vsel %vm408, %v416, %v372
      %v425 = vsel %vm409, %v417, %v379
      %v426 = vsel %vm410, %v418, %v386
      %vm427 = vcmp.lt.s32.totalorder %v419, 16
      %vm428 = vcmp.lt.s32.totalorder %v420, 16
      %vm429 = vcmp.lt.s32.totalorder %v421, 16
      %vm430 = vcmp.lt.s32.totalorder %v422, 16
      %vm431 = vcmp.lt.s32.totalorder %v423, 16
      %vm432 = vcmp.lt.s32.totalorder %v424, 16
      %vm433 = vcmp.lt.s32.totalorder %v425, 16
      %vm434 = vcmp.lt.s32.totalorder %v426, 16
      %vm435 = vcmp.ge.s32.totalorder %v419, 240
      %vm436 = vcmp.ge.s32.totalorder %v420, 240
      %vm437 = vcmp.ge.s32.totalorder %v421, 240
      %vm438 = vcmp.ge.s32.totalorder %v422, 240
      %vm439 = vcmp.ge.s32.totalorder %v423, 240
      %vm440 = vcmp.ge.s32.totalorder %v424, 240
      %vm441 = vcmp.ge.s32.totalorder %v425, 240
      %vm442 = vcmp.ge.s32.totalorder %v426, 240
      %v443 = vld [vmem:[%s193] sm:$0xff]
      %v444 = vld [vmem:[%s193 + $0x8] sm:$0xff]
      %v445 = vld [vmem:[%s193 + $0x10] sm:$0xff]
      %v446 = vld [vmem:[%s193 + $0x18] sm:$0xff]
      %v447 = vld [vmem:[%s193 + $0x20] sm:$0xff]
      %v448 = vld [vmem:[%s193 + $0x28] sm:$0xff]
      %v449 = vld [vmem:[%s193 + $0x30] sm:$0xff]
      %v450 = vld [vmem:[%s193 + $0x38] sm:$0xff]
      %451 = vrot.lane.b32.xlu0 %v443, 15
      %v452 = vpop.permute.xlu0 %451
      %453 = vrot.lane.b32.xlu0 %v444, 15
      %v454 = vpop.permute.xlu0 %453
      %455 = vrot.lane.b32.xlu0 %v445, 15
      %v456 = vpop.permute.xlu0 %455
      %457 = vrot.lane.b32.xlu0 %v446, 15
      %v458 = vpop.permute.xlu0 %457
      %459 = vrot.lane.b32.xlu0 %v447, 15
      %v460 = vpop.permute.xlu0 %459
      %461 = vrot.lane.b32.xlu0 %v448, 15
      %v462 = vpop.permute.xlu0 %461
      %463 = vrot.lane.b32.xlu0 %v449, 15
      %v464 = vpop.permute.xlu0 %463
      %465 = vrot.lane.b32.xlu0 %v450, 15
      %v466 = vpop.permute.xlu0 %465
      %vm467 = vcmp.lt.s32.totalorder %v211, 15
      %v468 = vsel %vm467, %v464, %v466
      %v469 = vsel %vm467, %v462, %v464
      %v470 = vsel %vm467, %v460, %v462
      %v471 = vsel %vm467, %v458, %v460
      %v472 = vsel %vm467, %v456, %v458
      %v473 = vsel %vm467, %v454, %v456
      %v474 = vsel %vm467, %v452, %v454
      %v475 = vsel %vm467, %v466, %v452
      %476 = vrot.lane.b32.xlu0 %v443, 127
      %v477 = vpop.permute.xlu0 %476
      %478 = vrot.lane.b32.xlu0 %v444, 127
      %v479 = vpop.permute.xlu0 %478
      %480 = vrot.lane.b32.xlu0 %v445, 127
      %v481 = vpop.permute.xlu0 %480
      %482 = vrot.lane.b32.xlu0 %v446, 127
      %v483 = vpop.permute.xlu0 %482
      %484 = vrot.lane.b32.xlu0 %v447, 127
      %v485 = vpop.permute.xlu0 %484
      %486 = vrot.lane.b32.xlu0 %v448, 127
      %v487 = vpop.permute.xlu0 %486
      %488 = vrot.lane.b32.xlu0 %v449, 127
      %v489 = vpop.permute.xlu0 %488
      %490 = vrot.lane.b32.xlu0 %v450, 127
      %v491 = vpop.permute.xlu0 %490
      %vm492 = vcmp.lt.s32.totalorder %v211, 127
      %v493 = vsel %vm492, %v489, %v491
      %v494 = vsel %vm492, %v487, %v489
      %v495 = vsel %vm492, %v485, %v487
      %v496 = vsel %vm492, %v483, %v485
      %v497 = vsel %vm492, %v481, %v483
      %v498 = vsel %vm492, %v479, %v481
      %v499 = vsel %vm492, %v477, %v479
      %v500 = vsel %vm492, %v491, %v477
      %v501 = vsel %vm315, %v475, %v499
      %v502 = vsel %vm316, %v474, %v498
      %v503 = vsel %vm317, %v473, %v497
      %v504 = vsel %vm318, %v472, %v496
      %v505 = vsel %vm319, %v471, %v495
      %v506 = vsel %vm320, %v470, %v494
      %v507 = vsel %vm321, %v469, %v493
      %v508 = vsel %vm322, %v468, %v500
      %509 = vrot.lane.b32.xlu0 %v443, 113
      %v510 = vpop.permute.xlu0 %509
      %511 = vrot.lane.b32.xlu0 %v444, 113
      %v512 = vpop.permute.xlu0 %511
      %513 = vrot.lane.b32.xlu0 %v445, 113
      %v514 = vpop.permute.xlu0 %513
      %515 = vrot.lane.b32.xlu0 %v446, 113
      %v516 = vpop.permute.xlu0 %515
      %517 = vrot.lane.b32.xlu0 %v447, 113
      %v518 = vpop.permute.xlu0 %517
      %519 = vrot.lane.b32.xlu0 %v448, 113
      %v520 = vpop.permute.xlu0 %519
      %521 = vrot.lane.b32.xlu0 %v449, 113
      %v522 = vpop.permute.xlu0 %521
      %523 = vrot.lane.b32.xlu0 %v450, 113
      %v524 = vpop.permute.xlu0 %523
      %vm525 = vcmp.lt.s32.totalorder %v211, 113
      %v526 = vsel %vm525, %v522, %v524
      %v527 = vsel %vm525, %v520, %v522
      %v528 = vsel %vm525, %v518, %v520
      %v529 = vsel %vm525, %v516, %v518
      %v530 = vsel %vm525, %v514, %v516
      %v531 = vsel %vm525, %v512, %v514
      %v532 = vsel %vm525, %v510, %v512
      %v533 = vsel %vm525, %v524, %v510
      %534 = vrot.lane.b32.xlu0 %v443, 1
      %v535 = vpop.permute.xlu0 %534
      %536 = vrot.lane.b32.xlu0 %v444, 1
      %v537 = vpop.permute.xlu0 %536
      %538 = vrot.lane.b32.xlu0 %v445, 1
      %v539 = vpop.permute.xlu0 %538
      %540 = vrot.lane.b32.xlu0 %v446, 1
      %v541 = vpop.permute.xlu0 %540
      %542 = vrot.lane.b32.xlu0 %v447, 1
      %v543 = vpop.permute.xlu0 %542
      %544 = vrot.lane.b32.xlu0 %v448, 1
      %v545 = vpop.permute.xlu0 %544
      %546 = vrot.lane.b32.xlu0 %v449, 1
      %v547 = vpop.permute.xlu0 %546
      %548 = vrot.lane.b32.xlu0 %v450, 1
      %v549 = vpop.permute.xlu0 %548
      %vm550 = vcmp.lt.s32.totalorder %v211, 1
      %v551 = vsel %vm550, %v547, %v549
      %v552 = vsel %vm550, %v545, %v547
      %v553 = vsel %vm550, %v543, %v545
      %v554 = vsel %vm550, %v541, %v543
      %v555 = vsel %vm550, %v539, %v541
      %v556 = vsel %vm550, %v537, %v539
      %v557 = vsel %vm550, %v535, %v537
      %v558 = vsel %vm550, %v549, %v535
      %v559 = vsel %vm323, %v532, %v558
      %v560 = vsel %vm324, %v531, %v557
      %v561 = vsel %vm325, %v530, %v556
      %v562 = vsel %vm326, %v529, %v555
      %v563 = vsel %vm327, %v528, %v554
      %v564 = vsel %vm328, %v527, %v553
      %v565 = vsel %vm329, %v526, %v552
      %v566 = vsel %vm330, %v533, %v551
      %v567 = vsub.f32 %v501, %v559
      %v568 = vsub.f32 %v502, %v560
      %v569 = vsub.f32 %v503, %v561
      %v570 = vsub.f32 %v504, %v562
      %v571 = vsub.f32 %v505, %v563
      %v572 = vsub.f32 %v506, %v564
      %v573 = vsub.f32 %v507, %v565
      %v574 = vsub.f32 %v508, %v566
      %v575 = vmul.f32 %v443, 2.0
      %v576 = vmul.f32 %v444, 2.0
      %v577 = vmul.f32 %v445, 2.0
      %v578 = vmul.f32 %v446, 2.0
      %v579 = vmul.f32 %v447, 2.0
      %v580 = vmul.f32 %v448, 2.0
      %v581 = vmul.f32 %v449, 2.0
      %v582 = vmul.f32 %v450, 2.0
      %v583 = vadd.f32 %v559, %v575
      %v584 = vadd.f32 %v560, %v576
      %v585 = vadd.f32 %v561, %v577
      %v586 = vadd.f32 %v562, %v578
      %v587 = vadd.f32 %v563, %v579
      %v588 = vadd.f32 %v564, %v580
      %v589 = vadd.f32 %v565, %v581
      %v590 = vadd.f32 %v566, %v582
      %v591 = vadd.f32 %v583, %v501
      %v592 = vadd.f32 %v584, %v502
      %v593 = vadd.f32 %v585, %v503
      %v594 = vadd.f32 %v586, %v504
      %v595 = vadd.f32 %v587, %v505
      %v596 = vadd.f32 %v588, %v506
      %v597 = vadd.f32 %v589, %v507
      %v598 = vadd.f32 %v590, %v508
      %599 = vrot.lane.b32.xlu0 %v567, 16
      %v600 = vpop.permute.xlu0 %599
      %601 = vrot.lane.b32.xlu0 %v568, 16
      %v602 = vpop.permute.xlu0 %601
      %603 = vrot.lane.b32.xlu0 %v569, 16
      %v604 = vpop.permute.xlu0 %603
      %605 = vrot.lane.b32.xlu0 %v570, 16
      %v606 = vpop.permute.xlu0 %605
      %607 = vrot.lane.b32.xlu0 %v571, 16
      %v608 = vpop.permute.xlu0 %607
      %609 = vrot.lane.b32.xlu0 %v572, 16
      %v610 = vpop.permute.xlu0 %609
      %611 = vrot.lane.b32.xlu0 %v573, 16
      %v612 = vpop.permute.xlu0 %611
      %613 = vrot.lane.b32.xlu0 %v574, 16
      %v614 = vpop.permute.xlu0 %613
      %vm615 = vcmp.lt.s32.totalorder %v211, 16
      %v616 = vsel %vm615, %v612, %v614
      %v617 = vsel %vm615, %v610, %v612
      %v618 = vsel %vm615, %v608, %v610
      %v619 = vsel %vm615, %v606, %v608
      %v620 = vsel %vm615, %v604, %v606
      %v621 = vsel %vm615, %v602, %v604
      %v622 = vsel %vm615, %v600, %v602
      %v623 = vsel %vm615, %v614, %v600
      %v624 = vsel %vm427, %v621, %v623
      %v625 = vsel %vm428, %v620, %v622
      %v626 = vsel %vm429, %v619, %v621
      %v627 = vsel %vm430, %v618, %v620
      %v628 = vsel %vm431, %v617, %v619
      %v629 = vsel %vm432, %v616, %v618
      %v630 = vsel %vm433, %v623, %v617
      %v631 = vsel %vm434, %v622, %v616
      %632 = vrot.lane.b32.xlu0 %v567, 112
      %v633 = vpop.permute.xlu0 %632
      %634 = vrot.lane.b32.xlu0 %v568, 112
      %v635 = vpop.permute.xlu0 %634
      %636 = vrot.lane.b32.xlu0 %v569, 112
      %v637 = vpop.permute.xlu0 %636
      %638 = vrot.lane.b32.xlu0 %v570, 112
      %v639 = vpop.permute.xlu0 %638
      %640 = vrot.lane.b32.xlu0 %v571, 112
      %v641 = vpop.permute.xlu0 %640
      %642 = vrot.lane.b32.xlu0 %v572, 112
      %v643 = vpop.permute.xlu0 %642
      %644 = vrot.lane.b32.xlu0 %v573, 112
      %v645 = vpop.permute.xlu0 %644
      %646 = vrot.lane.b32.xlu0 %v574, 112
      %v647 = vpop.permute.xlu0 %646
      %vm648 = vcmp.lt.s32.totalorder %v211, 112
      %v649 = vsel %vm648, %v645, %v647
      %v650 = vsel %vm648, %v643, %v645
      %v651 = vsel %vm648, %v641, %v643
      %v652 = vsel %vm648, %v639, %v641
      %v653 = vsel %vm648, %v637, %v639
      %v654 = vsel %vm648, %v635, %v637
      %v655 = vsel %vm648, %v633, %v635
      %v656 = vsel %vm648, %v647, %v633
      %v657 = vsel %vm435, %v649, %v655
      %v658 = vsel %vm436, %v656, %v654
      %v659 = vsel %vm437, %v655, %v653
      %v660 = vsel %vm438, %v654, %v652
      %v661 = vsel %vm439, %v653, %v651
      %v662 = vsel %vm440, %v652, %v650
      %v663 = vsel %vm441, %v651, %v649
      %v664 = vsel %vm442, %v650, %v656
      %v665 = vadd.f32 %v624, %v657
      %v666 = vadd.f32 %v625, %v658
      %v667 = vadd.f32 %v626, %v659
      %v668 = vadd.f32 %v627, %v660
      %v669 = vadd.f32 %v628, %v661
      %v670 = vadd.f32 %v629, %v662
      %v671 = vadd.f32 %v630, %v663
      %v672 = vadd.f32 %v631, %v664
      %v673 = vmul.f32 %v567, 2.0
      %v674 = vmul.f32 %v568, 2.0
      %v675 = vmul.f32 %v569, 2.0
      %v676 = vmul.f32 %v570, 2.0
      %v677 = vmul.f32 %v571, 2.0
      %v678 = vmul.f32 %v572, 2.0
      %v679 = vmul.f32 %v573, 2.0
      %v680 = vmul.f32 %v574, 2.0
      %v681 = vadd.f32 %v665, %v673
      %v682 = vadd.f32 %v666, %v674
      %v683 = vadd.f32 %v667, %v675
      %v684 = vadd.f32 %v668, %v676
      %v685 = vadd.f32 %v669, %v677
      %v686 = vadd.f32 %v670, %v678
      %v687 = vadd.f32 %v671, %v679
      %v688 = vadd.f32 %v672, %v680
      %v689 = vmul.f32 %v681, 0.125
      %v690 = vmul.f32 %v682, 0.125
      %v691 = vmul.f32 %v683, 0.125
      %v692 = vmul.f32 %v684, 0.125
      %v693 = vmul.f32 %v685, 0.125
      %v694 = vmul.f32 %v686, 0.125
      %v695 = vmul.f32 %v687, 0.125
      %v696 = vmul.f32 %v688, 0.125
      %697 = vrot.lane.b32.xlu0 %v591, 16
      %v698 = vpop.permute.xlu0 %697
      %699 = vrot.lane.b32.xlu0 %v592, 16
      %v700 = vpop.permute.xlu0 %699
      %701 = vrot.lane.b32.xlu0 %v593, 16
      %v702 = vpop.permute.xlu0 %701
      %703 = vrot.lane.b32.xlu0 %v594, 16
      %v704 = vpop.permute.xlu0 %703
      %705 = vrot.lane.b32.xlu0 %v595, 16
      %v706 = vpop.permute.xlu0 %705
      %707 = vrot.lane.b32.xlu0 %v596, 16
      %v708 = vpop.permute.xlu0 %707
      %709 = vrot.lane.b32.xlu0 %v597, 16
      %v710 = vpop.permute.xlu0 %709
      %711 = vrot.lane.b32.xlu0 %v598, 16
      %v712 = vpop.permute.xlu0 %711
      %v713 = vsel %vm615, %v710, %v712
      %v714 = vsel %vm615, %v708, %v710
      %v715 = vsel %vm615, %v706, %v708
      %v716 = vsel %vm615, %v704, %v706
      %v717 = vsel %vm615, %v702, %v704
      %v718 = vsel %vm615, %v700, %v702
      %v719 = vsel %vm615, %v698, %v700
      %v720 = vsel %vm615, %v712, %v698
      %v721 = vsel %vm427, %v718, %v720
      %v722 = vsel %vm428, %v717, %v719
      %v723 = vsel %vm429, %v716, %v718
      %v724 = vsel %vm430, %v715, %v717
      %v725 = vsel %vm431, %v714, %v716
      %v726 = vsel %vm432, %v713, %v715
      %v727 = vsel %vm433, %v720, %v714
      %v728 = vsel %vm434, %v719, %v713
      %729 = vrot.lane.b32.xlu0 %v591, 112
      %v730 = vpop.permute.xlu0 %729
      %731 = vrot.lane.b32.xlu0 %v592, 112
      %v732 = vpop.permute.xlu0 %731
      %733 = vrot.lane.b32.xlu0 %v593, 112
      %v734 = vpop.permute.xlu0 %733
      %735 = vrot.lane.b32.xlu0 %v594, 112
      %v736 = vpop.permute.xlu0 %735
      %737 = vrot.lane.b32.xlu0 %v595, 112
      %v738 = vpop.permute.xlu0 %737
      %739 = vrot.lane.b32.xlu0 %v596, 112
      %v740 = vpop.permute.xlu0 %739
      %741 = vrot.lane.b32.xlu0 %v597, 112
      %v742 = vpop.permute.xlu0 %741
      %743 = vrot.lane.b32.xlu0 %v598, 112
      %v744 = vpop.permute.xlu0 %743
      %v745 = vsel %vm648, %v742, %v744
      %v746 = vsel %vm648, %v740, %v742
      %v747 = vsel %vm648, %v738, %v740
      %v748 = vsel %vm648, %v736, %v738
      %v749 = vsel %vm648, %v734, %v736
      %v750 = vsel %vm648, %v732, %v734
      %v751 = vsel %vm648, %v730, %v732
      %v752 = vsel %vm648, %v744, %v730
      %v753 = vsel %vm435, %v745, %v751
      %v754 = vsel %vm436, %v752, %v750
      %v755 = vsel %vm437, %v751, %v749
      %v756 = vsel %vm438, %v750, %v748
      %v757 = vsel %vm439, %v749, %v747
      %v758 = vsel %vm440, %v748, %v746
      %v759 = vsel %vm441, %v747, %v745
      %v760 = vsel %vm442, %v746, %v752
      %v761 = vsub.f32 %v753, %v721
      %v762 = vsub.f32 %v754, %v722
      %v763 = vsub.f32 %v755, %v723
      %v764 = vsub.f32 %v756, %v724
      %v765 = vsub.f32 %v757, %v725
      %v766 = vsub.f32 %v758, %v726
      %v767 = vsub.f32 %v759, %v727
      %v768 = vsub.f32 %v760, %v728
      %v769 = vmul.f32 %v761, 0.125
      %v770 = vmul.f32 %v762, 0.125
      %v771 = vmul.f32 %v763, 0.125
      %v772 = vmul.f32 %v764, 0.125
      %v773 = vmul.f32 %v765, 0.125
      %v774 = vmul.f32 %v766, 0.125
      %v775 = vmul.f32 %v767, 0.125
      %v776 = vmul.f32 %v768, 0.125
      %v777 = vadd.f32 %v721, %v753
      %v778 = vadd.f32 %v722, %v754
      %v779 = vadd.f32 %v723, %v755
      %v780 = vadd.f32 %v724, %v756
      %v781 = vadd.f32 %v725, %v757
      %v782 = vadd.f32 %v726, %v758
      %v783 = vadd.f32 %v727, %v759
      %v784 = vadd.f32 %v728, %v760
      %v785 = vmul.f32 %v591, 2.0
      %v786 = vmul.f32 %v592, 2.0
      %v787 = vmul.f32 %v593, 2.0
      %v788 = vmul.f32 %v594, 2.0
      %v789 = vmul.f32 %v595, 2.0
      %v790 = vmul.f32 %v596, 2.0
      %v791 = vmul.f32 %v597, 2.0
      %v792 = vmul.f32 %v598, 2.0
      %v793 = vadd.f32 %v777, %v785
      %v794 = vadd.f32 %v778, %v786
      %v795 = vadd.f32 %v779, %v787
      %v796 = vadd.f32 %v780, %v788
      %v797 = vadd.f32 %v781, %v789
      %v798 = vadd.f32 %v782, %v790
      %v799 = vadd.f32 %v783, %v791
      %v800 = vadd.f32 %v784, %v792
      %v801 = vmul.f32 %v443, 16.0
      %v802 = vmul.f32 %v444, 16.0
      %v803 = vmul.f32 %v445, 16.0
      %v804 = vmul.f32 %v446, 16.0
      %v805 = vmul.f32 %v447, 16.0
      %v806 = vmul.f32 %v448, 16.0
      %v807 = vmul.f32 %v449, 16.0
      %v808 = vmul.f32 %v450, 16.0
      %v809 = vsub.f32 %v793, %v801
      %v810 = vsub.f32 %v794, %v802
      %v811 = vsub.f32 %v795, %v803
      %v812 = vsub.f32 %v796, %v804
      %v813 = vsub.f32 %v797, %v805
      %v814 = vsub.f32 %v798, %v806
      %v815 = vsub.f32 %v799, %v807
      %v816 = vsub.f32 %v800, %v808
      %v817 = vmul.f32 %v809, 0.0625
      %v818 = vmul.f32 %v810, 0.0625
      %v819 = vmul.f32 %v811, 0.0625
      %v820 = vmul.f32 %v812, 0.0625
      %v821 = vmul.f32 %v813, 0.0625
      %v822 = vmul.f32 %v814, 0.0625
      %v823 = vmul.f32 %v815, 0.0625
      %v824 = vmul.f32 %v816, 0.0625
      %826 = vset.pattern.permute.xlu0 0
      %827 = vperm.xlu0 %826, %v206
      %v828 = vpop.permute.xlu0 %827
      %831 = vset.pattern.permute.xlu0 0
      %832 = vperm.xlu0 %831, %v207
      %v833 = vpop.permute.xlu0 %832
      %836 = vset.pattern.permute.xlu0 0
      %837 = vperm.xlu0 %836, %v208
      %v838 = vpop.permute.xlu0 %837
      %841 = vset.pattern.permute.xlu0 0
      %842 = vperm.xlu0 %841, %v209
      %v843 = vpop.permute.xlu0 %842
      %vm845 = vcmask 261120
      %v847 = vsel %vm845, %v201, 0
      %v850 = vsel %vm845, %v202, 0
      %v853 = vsel %vm845, %v203, 0
      %v856 = vsel %vm845, %v204, 0
      %858 = vmatprep.subr.mxu0 0.0
      %859 = vmatpush1.msra.mxu0 0.0
      %860 = vmatprep.subr.mxu0 0.0
      %861 = vmatpush1.msra.mxu0 0.0
      %862 = vmatprep.subr.mxu0 0.0
      %863 = vmatpush1.msra.mxu0 0.0
      %864 = vmatprep.subr.mxu0 0.0
      %865 = vmatpush1.msra.mxu0 0.0
      %866 = vmatprep.subr.mxu0 0.0
      %867 = vmatpush1.msra.mxu0 0.0
      %868 = vmatprep.subr.mxu0 0.0
      %869 = vmatpush1.msra.mxu0 0.0
      %870 = vmatprep.subr.mxu0 0.0
      %871 = vmatpush1.msra.mxu0 0.0
      %872 = vmatprep.subr.mxu0 0.0
      %873 = vmatpush1.msra.mxu0 0.0
      %874 = vmatprep.subr.mxu0 0.0
      %875 = vmatpush1.msra.mxu0 0.0
      %876 = vmatprep.subr.mxu0 0.0
      %877 = vmatpush1.msra.mxu0 0.0
      %878 = vmatprep.subr.mxu0 0.0
      %879 = vmatpush1.msra.mxu0 0.0
      %880 = vmatprep.subr.mxu0 0.0
      %881 = vmatpush1.msra.mxu0 0.0
      %882 = vmatprep.subr.mxu0 %v818
      %883 = vmatpush1.msra.mxu0 %v817
      %884 = vmatprep.subr.mxu0 %v770
      %885 = vmatpush1.msra.mxu0 %v769
      %886 = vmatprep.subr.mxu0 %v690
      %887 = vmatpush1.msra.mxu0 %v689
      %888 = vmatprep.subr.mxu0 %v444
      %889 = vmatpush1.msra.mxu0 %v443
      %890 = vmatprep.subr.mxu0 0.0
      %891 = vmatpush2.msra.mxu0 0.0
      %892 = vmatprep.subr.mxu0 0.0
      %893 = vmatpush2.msra.mxu0 0.0
      %894 = vmatprep.subr.mxu0 0.0
      %895 = vmatpush2.msra.mxu0 0.0
      %896 = vmatprep.subr.mxu0 0.0
      %897 = vmatpush2.msra.mxu0 0.0
      %898 = vmatprep.subr.mxu0 0.0
      %899 = vmatpush2.msra.mxu0 0.0
      %900 = vmatprep.subr.mxu0 0.0
      %901 = vmatpush2.msra.mxu0 0.0
      %902 = vmatprep.subr.mxu0 0.0
      %903 = vmatpush2.msra.mxu0 0.0
      %904 = vmatprep.subr.mxu0 0.0
      %905 = vmatpush2.msra.mxu0 0.0
      %906 = vmatprep.subr.mxu0 0.0
      %907 = vmatpush2.msra.mxu0 0.0
      %908 = vmatprep.subr.mxu0 0.0
      %909 = vmatpush2.msra.mxu0 0.0
      %910 = vmatprep.subr.mxu0 0.0
      %911 = vmatpush2.msra.mxu0 0.0
      %912 = vmatprep.subr.mxu0 0.0
      %913 = vmatpush2.msra.mxu0 0.0
      %914 = vmatprep.subr.mxu0 0.0
      %915 = vmatpush2.msra.mxu0 0.0
      %916 = vmatprep.subr.mxu0 0.0
      %917 = vmatpush2.msra.mxu0 0.0
      %918 = vmatprep.subr.mxu0 0.0
      %919 = vmatpush2.msra.mxu0 0.0
      %920 = vmatprep.subr.mxu0 0.0
      %921 = vmatpush2.msra.mxu0 0.0
      %922 = vmatprep.mubr.f32.mxu0 0.0
      %923 = vmatmul.mubr.f32.gmra.mxu0 %v847
      %v924 = vpop.f32.mrf.mxu0
      %v925 = vadd.f32 %v828, %v924
      %v926 = vpop.f32.mrf.mxu0
      %v927 = vadd.f32 %v828, %v926
      %928 = vmatprep.mubr.f32.mxu0 0.0
      %929 = vmatmul.mubr.f32.gmra.mxu0 %v850
      %v930 = vpop.f32.mrf.mxu0
      %v931 = vadd.f32 %v833, %v930
      %v932 = vpop.f32.mrf.mxu0
      %v933 = vadd.f32 %v833, %v932
      %934 = vmatprep.mubr.f32.mxu0 0.0
      %935 = vmatmul.mubr.f32.gmra.mxu0 %v853
      %v936 = vpop.f32.mrf.mxu0
      %v937 = vadd.f32 %v838, %v936
      %v938 = vpop.f32.mrf.mxu0
      %v939 = vadd.f32 %v838, %v938
      %940 = vmatprep.mubr.f32.mxu0 0.0
      %941 = vmatmul.mubr.f32.gmra.mxu0 %v856
      %v942 = vpop.f32.mrf.mxu0
      %v943 = vadd.f32 %v843, %v942
      %v944 = vpop.f32.mrf.mxu0
      %v945 = vadd.f32 %v843, %v944
      %946 = vdwg.mxu0
      %947 = vmatprep.subr.mxu0 0.0
      %948 = vmatpush1.msra.mxu0 0.0
      %949 = vmatprep.subr.mxu0 0.0
      %950 = vmatpush1.msra.mxu0 0.0
      %951 = vmatprep.subr.mxu0 0.0
      %952 = vmatpush1.msra.mxu0 0.0
      %953 = vmatprep.subr.mxu0 0.0
      %954 = vmatpush1.msra.mxu0 0.0
      %955 = vmatprep.subr.mxu0 0.0
      %956 = vmatpush1.msra.mxu0 0.0
      %957 = vmatprep.subr.mxu0 0.0
      %958 = vmatpush1.msra.mxu0 0.0
      %959 = vmatprep.subr.mxu0 0.0
      %960 = vmatpush1.msra.mxu0 0.0
      %961 = vmatprep.subr.mxu0 0.0
      %962 = vmatpush1.msra.mxu0 0.0
      %963 = vmatprep.subr.mxu0 0.0
      %964 = vmatpush1.msra.mxu0 0.0
      %965 = vmatprep.subr.mxu0 0.0
      %966 = vmatpush1.msra.mxu0 0.0
      %967 = vmatprep.subr.mxu0 0.0
      %968 = vmatpush1.msra.mxu0 0.0
      %969 = vmatprep.subr.mxu0 0.0
      %970 = vmatpush1.msra.mxu0 0.0
      %971 = vmatprep.subr.mxu0 %v820
      %972 = vmatpush1.msra.mxu0 %v819
      %973 = vmatprep.subr.mxu0 %v772
      %974 = vmatpush1.msra.mxu0 %v771
      %975 = vmatprep.subr.mxu0 %v692
      %976 = vmatpush1.msra.mxu0 %v691
      %977 = vmatprep.subr.mxu0 %v446
      %978 = vmatpush1.msra.mxu0 %v445
      %979 = vmatprep.subr.mxu0 0.0
      %980 = vmatpush2.msra.mxu0 0.0
      %981 = vmatprep.subr.mxu0 0.0
      %982 = vmatpush2.msra.mxu0 0.0
      %983 = vmatprep.subr.mxu0 0.0
      %984 = vmatpush2.msra.mxu0 0.0
      %985 = vmatprep.subr.mxu0 0.0
      %986 = vmatpush2.msra.mxu0 0.0
      %987 = vmatprep.subr.mxu0 0.0
      %988 = vmatpush2.msra.mxu0 0.0
      %989 = vmatprep.subr.mxu0 0.0
      %990 = vmatpush2.msra.mxu0 0.0
      %991 = vmatprep.subr.mxu0 0.0
      %992 = vmatpush2.msra.mxu0 0.0
      %993 = vmatprep.subr.mxu0 0.0
      %994 = vmatpush2.msra.mxu0 0.0
      %995 = vmatprep.subr.mxu0 0.0
      %996 = vmatpush2.msra.mxu0 0.0
      %997 = vmatprep.subr.mxu0 0.0
      %998 = vmatpush2.msra.mxu0 0.0
      %999 = vmatprep.subr.mxu0 0.0
      %1000 = vmatpush2.msra.mxu0 0.0
      %1001 = vmatprep.subr.mxu0 0.0
      %1002 = vmatpush2.msra.mxu0 0.0
      %1003 = vmatprep.subr.mxu0 0.0
      %1004 = vmatpush2.msra.mxu0 0.0
      %1005 = vmatprep.subr.mxu0 0.0
      %1006 = vmatpush2.msra.mxu0 0.0
      %1007 = vmatprep.subr.mxu0 0.0
      %1008 = vmatpush2.msra.mxu0 0.0
      %1009 = vmatprep.subr.mxu0 0.0
      %1010 = vmatpush2.msra.mxu0 0.0
      %1011 = vmatprep.mubr.f32.mxu0 0.0
      %1012 = vmatmul.mubr.f32.gmra.mxu0 %v847
      %v1013 = vpop.f32.mrf.mxu0
      %v1014 = vadd.f32 %v828, %v1013
      %v1015 = vpop.f32.mrf.mxu0
      %v1016 = vadd.f32 %v828, %v1015
      %1017 = vmatprep.mubr.f32.mxu0 0.0
      %1018 = vmatmul.mubr.f32.gmra.mxu0 %v850
      %v1019 = vpop.f32.mrf.mxu0
      %v1020 = vadd.f32 %v833, %v1019
      %v1021 = vpop.f32.mrf.mxu0
      %v1022 = vadd.f32 %v833, %v1021
      %1023 = vmatprep.mubr.f32.mxu0 0.0
      %1024 = vmatmul.mubr.f32.gmra.mxu0 %v853
      %v1025 = vpop.f32.mrf.mxu0
      %v1026 = vadd.f32 %v838, %v1025
      %v1027 = vpop.f32.mrf.mxu0
      %v1028 = vadd.f32 %v838, %v1027
      %1029 = vmatprep.mubr.f32.mxu0 0.0
      %1030 = vmatmul.mubr.f32.gmra.mxu0 %v856
      %v1031 = vpop.f32.mrf.mxu0
      %v1032 = vadd.f32 %v843, %v1031
      %v1033 = vpop.f32.mrf.mxu0
      %v1034 = vadd.f32 %v843, %v1033
      %1035 = vdwg.mxu0
      %1036 = vmatprep.subr.mxu0 0.0
      %1037 = vmatpush1.msra.mxu0 0.0
      %1038 = vmatprep.subr.mxu0 0.0
      %1039 = vmatpush1.msra.mxu0 0.0
      %1040 = vmatprep.subr.mxu0 0.0
      %1041 = vmatpush1.msra.mxu0 0.0
      %1042 = vmatprep.subr.mxu0 0.0
      %1043 = vmatpush1.msra.mxu0 0.0
      %1044 = vmatprep.subr.mxu0 0.0
      %1045 = vmatpush1.msra.mxu0 0.0
      %1046 = vmatprep.subr.mxu0 0.0
      %1047 = vmatpush1.msra.mxu0 0.0
      %1048 = vmatprep.subr.mxu0 0.0
      %1049 = vmatpush1.msra.mxu0 0.0
      %1050 = vmatprep.subr.mxu0 0.0
      %1051 = vmatpush1.msra.mxu0 0.0
      %1052 = vmatprep.subr.mxu0 0.0
      %1053 = vmatpush1.msra.mxu0 0.0
      %1054 = vmatprep.subr.mxu0 0.0
      %1055 = vmatpush1.msra.mxu0 0.0
      %1056 = vmatprep.subr.mxu0 0.0
      %1057 = vmatpush1.msra.mxu0 0.0
      %1058 = vmatprep.subr.mxu0 0.0
      %1059 = vmatpush1.msra.mxu0 0.0
      %1060 = vmatprep.subr.mxu0 %v822
      %1061 = vmatpush1.msra.mxu0 %v821
      %1062 = vmatprep.subr.mxu0 %v774
      %1063 = vmatpush1.msra.mxu0 %v773
      %1064 = vmatprep.subr.mxu0 %v694
      %1065 = vmatpush1.msra.mxu0 %v693
      %1066 = vmatprep.subr.mxu0 %v448
      %1067 = vmatpush1.msra.mxu0 %v447
      %1068 = vmatprep.subr.mxu0 0.0
      %1069 = vmatpush2.msra.mxu0 0.0
      %1070 = vmatprep.subr.mxu0 0.0
      %1071 = vmatpush2.msra.mxu0 0.0
      %1072 = vmatprep.subr.mxu0 0.0
      %1073 = vmatpush2.msra.mxu0 0.0
      %1074 = vmatprep.subr.mxu0 0.0
      %1075 = vmatpush2.msra.mxu0 0.0
      %1076 = vmatprep.subr.mxu0 0.0
      %1077 = vmatpush2.msra.mxu0 0.0
      %1078 = vmatprep.subr.mxu0 0.0
      %1079 = vmatpush2.msra.mxu0 0.0
      %1080 = vmatprep.subr.mxu0 0.0
      %1081 = vmatpush2.msra.mxu0 0.0
      %1082 = vmatprep.subr.mxu0 0.0
      %1083 = vmatpush2.msra.mxu0 0.0
      %1084 = vmatprep.subr.mxu0 0.0
      %1085 = vmatpush2.msra.mxu0 0.0
      %1086 = vmatprep.subr.mxu0 0.0
      %1087 = vmatpush2.msra.mxu0 0.0
      %1088 = vmatprep.subr.mxu0 0.0
      %1089 = vmatpush2.msra.mxu0 0.0
      %1090 = vmatprep.subr.mxu0 0.0
      %1091 = vmatpush2.msra.mxu0 0.0
      %1092 = vmatprep.subr.mxu0 0.0
      %1093 = vmatpush2.msra.mxu0 0.0
      %1094 = vmatprep.subr.mxu0 0.0
      %1095 = vmatpush2.msra.mxu0 0.0
      %1096 = vmatprep.subr.mxu0 0.0
      %1097 = vmatpush2.msra.mxu0 0.0
      %1098 = vmatprep.subr.mxu0 0.0
      %1099 = vmatpush2.msra.mxu0 0.0
      %1100 = vmatprep.mubr.f32.mxu0 0.0
      %1101 = vmatmul.mubr.f32.gmra.mxu0 %v847
      %v1102 = vpop.f32.mrf.mxu0
      %v1103 = vadd.f32 %v828, %v1102
      %v1104 = vpop.f32.mrf.mxu0
      %v1105 = vadd.f32 %v828, %v1104
      %1106 = vmatprep.mubr.f32.mxu0 0.0
      %1107 = vmatmul.mubr.f32.gmra.mxu0 %v850
      %v1108 = vpop.f32.mrf.mxu0
      %v1109 = vadd.f32 %v833, %v1108
      %v1110 = vpop.f32.mrf.mxu0
      %v1111 = vadd.f32 %v833, %v1110
      %1112 = vmatprep.mubr.f32.mxu0 0.0
      %1113 = vmatmul.mubr.f32.gmra.mxu0 %v853
      %v1114 = vpop.f32.mrf.mxu0
      %v1115 = vadd.f32 %v838, %v1114
      %v1116 = vpop.f32.mrf.mxu0
      %v1117 = vadd.f32 %v838, %v1116
      %1118 = vmatprep.mubr.f32.mxu0 0.0
      %1119 = vmatmul.mubr.f32.gmra.mxu0 %v856
      %v1120 = vpop.f32.mrf.mxu0
      %v1121 = vadd.f32 %v843, %v1120
      %v1122 = vpop.f32.mrf.mxu0
      %v1123 = vadd.f32 %v843, %v1122
      %1124 = vdwg.mxu0
      %1125 = vmatprep.subr.mxu0 0.0
      %1126 = vmatpush1.msra.mxu0 0.0
      %1127 = vmatprep.subr.mxu0 0.0
      %1128 = vmatpush1.msra.mxu0 0.0
      %1129 = vmatprep.subr.mxu0 0.0
      %1130 = vmatpush1.msra.mxu0 0.0
      %1131 = vmatprep.subr.mxu0 0.0
      %1132 = vmatpush1.msra.mxu0 0.0
      %1133 = vmatprep.subr.mxu0 0.0
      %1134 = vmatpush1.msra.mxu0 0.0
      %1135 = vmatprep.subr.mxu0 0.0
      %1136 = vmatpush1.msra.mxu0 0.0
      %1137 = vmatprep.subr.mxu0 0.0
      %1138 = vmatpush1.msra.mxu0 0.0
      %1139 = vmatprep.subr.mxu0 0.0
      %1140 = vmatpush1.msra.mxu0 0.0
      %1141 = vmatprep.subr.mxu0 0.0
      %1142 = vmatpush1.msra.mxu0 0.0
      %1143 = vmatprep.subr.mxu0 0.0
      %1144 = vmatpush1.msra.mxu0 0.0
      %1145 = vmatprep.subr.mxu0 0.0
      %1146 = vmatpush1.msra.mxu0 0.0
      %1147 = vmatprep.subr.mxu0 0.0
      %1148 = vmatpush1.msra.mxu0 0.0
      %1149 = vmatprep.subr.mxu0 %v824
      %1150 = vmatpush1.msra.mxu0 %v823
      %1151 = vmatprep.subr.mxu0 %v776
      %1152 = vmatpush1.msra.mxu0 %v775
      %1153 = vmatprep.subr.mxu0 %v696
      %1154 = vmatpush1.msra.mxu0 %v695
      %1155 = vmatprep.subr.mxu0 %v450
      %1156 = vmatpush1.msra.mxu0 %v449
      %1157 = vmatprep.subr.mxu0 0.0
      %1158 = vmatpush2.msra.mxu0 0.0
      %1159 = vmatprep.subr.mxu0 0.0
      %1160 = vmatpush2.msra.mxu0 0.0
      %1161 = vmatprep.subr.mxu0 0.0
      %1162 = vmatpush2.msra.mxu0 0.0
      %1163 = vmatprep.subr.mxu0 0.0
      %1164 = vmatpush2.msra.mxu0 0.0
      %1165 = vmatprep.subr.mxu0 0.0
      %1166 = vmatpush2.msra.mxu0 0.0
      %1167 = vmatprep.subr.mxu0 0.0
      %1168 = vmatpush2.msra.mxu0 0.0
      %1169 = vmatprep.subr.mxu0 0.0
      %1170 = vmatpush2.msra.mxu0 0.0
      %1171 = vmatprep.subr.mxu0 0.0
      %1172 = vmatpush2.msra.mxu0 0.0
      %1173 = vmatprep.subr.mxu0 0.0
      %1174 = vmatpush2.msra.mxu0 0.0
      %1175 = vmatprep.subr.mxu0 0.0
      %1176 = vmatpush2.msra.mxu0 0.0
      %1177 = vmatprep.subr.mxu0 0.0
      %1178 = vmatpush2.msra.mxu0 0.0
      %1179 = vmatprep.subr.mxu0 0.0
      %1180 = vmatpush2.msra.mxu0 0.0
      %1181 = vmatprep.subr.mxu0 0.0
      %1182 = vmatpush2.msra.mxu0 0.0
      %1183 = vmatprep.subr.mxu0 0.0
      %1184 = vmatpush2.msra.mxu0 0.0
      %1185 = vmatprep.subr.mxu0 0.0
      %1186 = vmatpush2.msra.mxu0 0.0
      %1187 = vmatprep.subr.mxu0 0.0
      %1188 = vmatpush2.msra.mxu0 0.0
      %1189 = vmatprep.mubr.f32.mxu0 0.0
      %1190 = vmatmul.mubr.f32.gmra.mxu0 %v847
      %v1191 = vpop.f32.mrf.mxu0
      %v1192 = vadd.f32 %v828, %v1191
      %v1193 = vpop.f32.mrf.mxu0
      %v1194 = vadd.f32 %v828, %v1193
      %1195 = vmatprep.mubr.f32.mxu0 0.0
      %1196 = vmatmul.mubr.f32.gmra.mxu0 %v850
      %v1197 = vpop.f32.mrf.mxu0
      %v1198 = vadd.f32 %v833, %v1197
      %v1199 = vpop.f32.mrf.mxu0
      %v1200 = vadd.f32 %v833, %v1199
      %1201 = vmatprep.mubr.f32.mxu0 0.0
      %1202 = vmatmul.mubr.f32.gmra.mxu0 %v853
      %v1203 = vpop.f32.mrf.mxu0
      %v1204 = vadd.f32 %v838, %v1203
      %v1205 = vpop.f32.mrf.mxu0
      %v1206 = vadd.f32 %v838, %v1205
      %1207 = vmatprep.mubr.f32.mxu0 0.0
      %1208 = vmatmul.mubr.f32.gmra.mxu0 %v856
      %v1209 = vpop.f32.mrf.mxu0
      %v1210 = vadd.f32 %v843, %v1209
      %v1211 = vpop.f32.mrf.mxu0
      %v1212 = vadd.f32 %v843, %v1211
      %1213 = vdwg.mxu0
      %v1214 = vmax.f32 %v925, 0.0
      %v1215 = vmax.f32 %v927, 0.0
      %v1216 = vmax.f32 %v1014, 0.0
      %v1217 = vmax.f32 %v1016, 0.0
      %v1218 = vmax.f32 %v1103, 0.0
      %v1219 = vmax.f32 %v1105, 0.0
      %v1220 = vmax.f32 %v1192, 0.0
      %v1221 = vmax.f32 %v1194, 0.0
      %v1222 = vmax.f32 %v931, 0.0
      %v1223 = vmax.f32 %v933, 0.0
      %v1224 = vmax.f32 %v1020, 0.0
      %v1225 = vmax.f32 %v1022, 0.0
      %v1226 = vmax.f32 %v1109, 0.0
      %v1227 = vmax.f32 %v1111, 0.0
      %v1228 = vmax.f32 %v1198, 0.0
      %v1229 = vmax.f32 %v1200, 0.0
      %v1230 = vmax.f32 %v937, 0.0
      %v1231 = vmax.f32 %v939, 0.0
      %v1232 = vmax.f32 %v1026, 0.0
      %v1233 = vmax.f32 %v1028, 0.0
      %v1234 = vmax.f32 %v1115, 0.0
      %v1235 = vmax.f32 %v1117, 0.0
      %v1236 = vmax.f32 %v1204, 0.0
      %v1237 = vmax.f32 %v1206, 0.0
      %v1238 = vmax.f32 %v943, 0.0
      %v1239 = vmax.f32 %v945, 0.0
      %v1240 = vmax.f32 %v1032, 0.0
      %v1241 = vmax.f32 %v1034, 0.0
      %v1242 = vmax.f32 %v1121, 0.0
      %v1243 = vmax.f32 %v1123, 0.0
      %v1244 = vmax.f32 %v1210, 0.0
      %v1245 = vmax.f32 %v1212, 0.0
      %v1247 = vsel %vm845, %v205, 0
      %1249 = vmatprep.subr.mxu0 0.0
      %1250 = vmatpush1.msra.mxu0 0.0
      %1251 = vmatprep.subr.mxu0 0.0
      %1252 = vmatpush1.msra.mxu0 0.0
      %1253 = vmatprep.subr.mxu0 0.0
      %1254 = vmatpush1.msra.mxu0 0.0
      %1255 = vmatprep.subr.mxu0 0.0
      %1256 = vmatpush1.msra.mxu0 0.0
      %1257 = vmatprep.subr.mxu0 0.0
      %1258 = vmatpush1.msra.mxu0 0.0
      %1259 = vmatprep.subr.mxu0 0.0
      %1260 = vmatpush1.msra.mxu0 0.0
      %1261 = vmatprep.subr.mxu0 0.0
      %1262 = vmatpush1.msra.mxu0 0.0
      %1263 = vmatprep.subr.mxu0 0.0
      %1264 = vmatpush1.msra.mxu0 0.0
      %1265 = vmatprep.subr.mxu0 0.0
      %1266 = vmatpush1.msra.mxu0 0.0
      %1267 = vmatprep.subr.mxu0 0.0
      %1268 = vmatpush1.msra.mxu0 0.0
      %1269 = vmatprep.subr.mxu0 0.0
      %1270 = vmatpush1.msra.mxu0 0.0
      %1271 = vmatprep.subr.mxu0 0.0
      %1272 = vmatpush1.msra.mxu0 0.0
      %1273 = vmatprep.subr.mxu0 %v1239
      %1274 = vmatpush1.msra.mxu0 %v1238
      %1275 = vmatprep.subr.mxu0 %v1231
      %1276 = vmatpush1.msra.mxu0 %v1230
      %1277 = vmatprep.subr.mxu0 %v1223
      %1278 = vmatpush1.msra.mxu0 %v1222
      %1279 = vmatprep.subr.mxu0 %v1215
      %1280 = vmatpush1.msra.mxu0 %v1214
      %1281 = vmatprep.subr.mxu0 0.0
      %1282 = vmatpush2.msra.mxu0 0.0
      %1283 = vmatprep.subr.mxu0 0.0
      %1284 = vmatpush2.msra.mxu0 0.0
      %1285 = vmatprep.subr.mxu0 0.0
      %1286 = vmatpush2.msra.mxu0 0.0
      %1287 = vmatprep.subr.mxu0 0.0
      %1288 = vmatpush2.msra.mxu0 0.0
      %1289 = vmatprep.subr.mxu0 0.0
      %1290 = vmatpush2.msra.mxu0 0.0
      %1291 = vmatprep.subr.mxu0 0.0
      %1292 = vmatpush2.msra.mxu0 0.0
      %1293 = vmatprep.subr.mxu0 0.0
      %1294 = vmatpush2.msra.mxu0 0.0
      %1295 = vmatprep.subr.mxu0 0.0
      %1296 = vmatpush2.msra.mxu0 0.0
      %1297 = vmatprep.subr.mxu0 0.0
      %1298 = vmatpush2.msra.mxu0 0.0
      %1299 = vmatprep.subr.mxu0 0.0
      %1300 = vmatpush2.msra.mxu0 0.0
      %1301 = vmatprep.subr.mxu0 0.0
      %1302 = vmatpush2.msra.mxu0 0.0
      %1303 = vmatprep.subr.mxu0 0.0
      %1304 = vmatpush2.msra.mxu0 0.0
      %1305 = vmatprep.subr.mxu0 0.0
      %1306 = vmatpush2.msra.mxu0 0.0
      %1307 = vmatprep.subr.mxu0 0.0
      %1308 = vmatpush2.msra.mxu0 0.0
      %1309 = vmatprep.subr.mxu0 0.0
      %1310 = vmatpush2.msra.mxu0 0.0
      %1311 = vmatprep.subr.mxu0 0.0
      %1312 = vmatpush2.msra.mxu0 0.0
      %1313 = vmatprep.mubr.f32.mxu0 0.0
      %1314 = vmatmul.mubr.f32.gmra.mxu0 %v1247
      %v1315 = vpop.f32.mrf.mxu0
      %v1316 = vadd.f32 0.0, %v1315
      %v1317 = vpop.f32.mrf.mxu0
      %v1318 = vadd.f32 0.0, %v1317
      %1319 = vdwg.mxu0
      %1320 = vmatprep.subr.mxu0 0.0
      %1321 = vmatpush1.msra.mxu0 0.0
      %1322 = vmatprep.subr.mxu0 0.0
      %1323 = vmatpush1.msra.mxu0 0.0
      %1324 = vmatprep.subr.mxu0 0.0
      %1325 = vmatpush1.msra.mxu0 0.0
      %1326 = vmatprep.subr.mxu0 0.0
      %1327 = vmatpush1.msra.mxu0 0.0
      %1328 = vmatprep.subr.mxu0 0.0
      %1329 = vmatpush1.msra.mxu0 0.0
      %1330 = vmatprep.subr.mxu0 0.0
      %1331 = vmatpush1.msra.mxu0 0.0
      %1332 = vmatprep.subr.mxu0 0.0
      %1333 = vmatpush1.msra.mxu0 0.0
      %1334 = vmatprep.subr.mxu0 0.0
      %1335 = vmatpush1.msra.mxu0 0.0
      %1336 = vmatprep.subr.mxu0 0.0
      %1337 = vmatpush1.msra.mxu0 0.0
      %1338 = vmatprep.subr.mxu0 0.0
      %1339 = vmatpush1.msra.mxu0 0.0
      %1340 = vmatprep.subr.mxu0 0.0
      %1341 = vmatpush1.msra.mxu0 0.0
      %1342 = vmatprep.subr.mxu0 0.0
      %1343 = vmatpush1.msra.mxu0 0.0
      %1344 = vmatprep.subr.mxu0 %v1241
      %1345 = vmatpush1.msra.mxu0 %v1240
      %1346 = vmatprep.subr.mxu0 %v1233
      %1347 = vmatpush1.msra.mxu0 %v1232
      %1348 = vmatprep.subr.mxu0 %v1225
      %1349 = vmatpush1.msra.mxu0 %v1224
      %1350 = vmatprep.subr.mxu0 %v1217
      %1351 = vmatpush1.msra.mxu0 %v1216
      %1352 = vmatprep.subr.mxu0 0.0
      %1353 = vmatpush2.msra.mxu0 0.0
      %1354 = vmatprep.subr.mxu0 0.0
      %1355 = vmatpush2.msra.mxu0 0.0
      %1356 = vmatprep.subr.mxu0 0.0
      %1357 = vmatpush2.msra.mxu0 0.0
      %1358 = vmatprep.subr.mxu0 0.0
      %1359 = vmatpush2.msra.mxu0 0.0
      %1360 = vmatprep.subr.mxu0 0.0
      %1361 = vmatpush2.msra.mxu0 0.0
      %1362 = vmatprep.subr.mxu0 0.0
      %1363 = vmatpush2.msra.mxu0 0.0
      %1364 = vmatprep.subr.mxu0 0.0
      %1365 = vmatpush2.msra.mxu0 0.0
      %1366 = vmatprep.subr.mxu0 0.0
      %1367 = vmatpush2.msra.mxu0 0.0
      %1368 = vmatprep.subr.mxu0 0.0
      %1369 = vmatpush2.msra.mxu0 0.0
      %1370 = vmatprep.subr.mxu0 0.0
      %1371 = vmatpush2.msra.mxu0 0.0
      %1372 = vmatprep.subr.mxu0 0.0
      %1373 = vmatpush2.msra.mxu0 0.0
      %1374 = vmatprep.subr.mxu0 0.0
      %1375 = vmatpush2.msra.mxu0 0.0
      %1376 = vmatprep.subr.mxu0 0.0
      %1377 = vmatpush2.msra.mxu0 0.0
      %1378 = vmatprep.subr.mxu0 0.0
      %1379 = vmatpush2.msra.mxu0 0.0
      %1380 = vmatprep.subr.mxu0 0.0
      %1381 = vmatpush2.msra.mxu0 0.0
      %1382 = vmatprep.subr.mxu0 0.0
      %1383 = vmatpush2.msra.mxu0 0.0
      %1384 = vmatprep.mubr.f32.mxu0 0.0
      %1385 = vmatmul.mubr.f32.gmra.mxu0 %v1247
      %v1386 = vpop.f32.mrf.mxu0
      %v1387 = vadd.f32 0.0, %v1386
      %v1388 = vpop.f32.mrf.mxu0
      %v1389 = vadd.f32 0.0, %v1388
      %1390 = vdwg.mxu0
      %1391 = vmatprep.subr.mxu0 0.0
      %1392 = vmatpush1.msra.mxu0 0.0
      %1393 = vmatprep.subr.mxu0 0.0
      %1394 = vmatpush1.msra.mxu0 0.0
      %1395 = vmatprep.subr.mxu0 0.0
      %1396 = vmatpush1.msra.mxu0 0.0
      %1397 = vmatprep.subr.mxu0 0.0
      %1398 = vmatpush1.msra.mxu0 0.0
      %1399 = vmatprep.subr.mxu0 0.0
      %1400 = vmatpush1.msra.mxu0 0.0
      %1401 = vmatprep.subr.mxu0 0.0
      %1402 = vmatpush1.msra.mxu0 0.0
      %1403 = vmatprep.subr.mxu0 0.0
      %1404 = vmatpush1.msra.mxu0 0.0
      %1405 = vmatprep.subr.mxu0 0.0
      %1406 = vmatpush1.msra.mxu0 0.0
      %1407 = vmatprep.subr.mxu0 0.0
      %1408 = vmatpush1.msra.mxu0 0.0
      %1409 = vmatprep.subr.mxu0 0.0
      %1410 = vmatpush1.msra.mxu0 0.0
      %1411 = vmatprep.subr.mxu0 0.0
      %1412 = vmatpush1.msra.mxu0 0.0
      %1413 = vmatprep.subr.mxu0 0.0
      %1414 = vmatpush1.msra.mxu0 0.0
      %1415 = vmatprep.subr.mxu0 %v1243
      %1416 = vmatpush1.msra.mxu0 %v1242
      %1417 = vmatprep.subr.mxu0 %v1235
      %1418 = vmatpush1.msra.mxu0 %v1234
      %1419 = vmatprep.subr.mxu0 %v1227
      %1420 = vmatpush1.msra.mxu0 %v1226
      %1421 = vmatprep.subr.mxu0 %v1219
      %1422 = vmatpush1.msra.mxu0 %v1218
      %1423 = vmatprep.subr.mxu0 0.0
      %1424 = vmatpush2.msra.mxu0 0.0
      %1425 = vmatprep.subr.mxu0 0.0
      %1426 = vmatpush2.msra.mxu0 0.0
      %1427 = vmatprep.subr.mxu0 0.0
      %1428 = vmatpush2.msra.mxu0 0.0
      %1429 = vmatprep.subr.mxu0 0.0
      %1430 = vmatpush2.msra.mxu0 0.0
      %1431 = vmatprep.subr.mxu0 0.0
      %1432 = vmatpush2.msra.mxu0 0.0
      %1433 = vmatprep.subr.mxu0 0.0
      %1434 = vmatpush2.msra.mxu0 0.0
      %1435 = vmatprep.subr.mxu0 0.0
      %1436 = vmatpush2.msra.mxu0 0.0
      %1437 = vmatprep.subr.mxu0 0.0
      %1438 = vmatpush2.msra.mxu0 0.0
      %1439 = vmatprep.subr.mxu0 0.0
      %1440 = vmatpush2.msra.mxu0 0.0
      %1441 = vmatprep.subr.mxu0 0.0
      %1442 = vmatpush2.msra.mxu0 0.0
      %1443 = vmatprep.subr.mxu0 0.0
      %1444 = vmatpush2.msra.mxu0 0.0
      %1445 = vmatprep.subr.mxu0 0.0
      %1446 = vmatpush2.msra.mxu0 0.0
      %1447 = vmatprep.subr.mxu0 0.0
      %1448 = vmatpush2.msra.mxu0 0.0
      %1449 = vmatprep.subr.mxu0 0.0
      %1450 = vmatpush2.msra.mxu0 0.0
      %1451 = vmatprep.subr.mxu0 0.0
      %1452 = vmatpush2.msra.mxu0 0.0
      %1453 = vmatprep.subr.mxu0 0.0
      %1454 = vmatpush2.msra.mxu0 0.0
      %1455 = vmatprep.mubr.f32.mxu0 0.0
      %1456 = vmatmul.mubr.f32.gmra.mxu0 %v1247
      %v1457 = vpop.f32.mrf.mxu0
      %v1458 = vadd.f32 0.0, %v1457
      %v1459 = vpop.f32.mrf.mxu0
      %v1460 = vadd.f32 0.0, %v1459
      %1461 = vdwg.mxu0
      %1462 = vmatprep.subr.mxu0 0.0
      %1463 = vmatpush1.msra.mxu0 0.0
      %1464 = vmatprep.subr.mxu0 0.0
      %1465 = vmatpush1.msra.mxu0 0.0
      %1466 = vmatprep.subr.mxu0 0.0
      %1467 = vmatpush1.msra.mxu0 0.0
      %1468 = vmatprep.subr.mxu0 0.0
      %1469 = vmatpush1.msra.mxu0 0.0
      %1470 = vmatprep.subr.mxu0 0.0
      %1471 = vmatpush1.msra.mxu0 0.0
      %1472 = vmatprep.subr.mxu0 0.0
      %1473 = vmatpush1.msra.mxu0 0.0
      %1474 = vmatprep.subr.mxu0 0.0
      %1475 = vmatpush1.msra.mxu0 0.0
      %1476 = vmatprep.subr.mxu0 0.0
      %1477 = vmatpush1.msra.mxu0 0.0
      %1478 = vmatprep.subr.mxu0 0.0
      %1479 = vmatpush1.msra.mxu0 0.0
      %1480 = vmatprep.subr.mxu0 0.0
      %1481 = vmatpush1.msra.mxu0 0.0
      %1482 = vmatprep.subr.mxu0 0.0
      %1483 = vmatpush1.msra.mxu0 0.0
      %1484 = vmatprep.subr.mxu0 0.0
      %1485 = vmatpush1.msra.mxu0 0.0
      %1486 = vmatprep.subr.mxu0 %v1245
      %1487 = vmatpush1.msra.mxu0 %v1244
      %1488 = vmatprep.subr.mxu0 %v1237
      %1489 = vmatpush1.msra.mxu0 %v1236
      %1490 = vmatprep.subr.mxu0 %v1229
      %1491 = vmatpush1.msra.mxu0 %v1228
      %1492 = vmatprep.subr.mxu0 %v1221
      %1493 = vmatpush1.msra.mxu0 %v1220
      %1494 = vmatprep.subr.mxu0 0.0
      %1495 = vmatpush2.msra.mxu0 0.0
      %1496 = vmatprep.subr.mxu0 0.0
      %1497 = vmatpush2.msra.mxu0 0.0
      %1498 = vmatprep.subr.mxu0 0.0
      %1499 = vmatpush2.msra.mxu0 0.0
      %1500 = vmatprep.subr.mxu0 0.0
      %1501 = vmatpush2.msra.mxu0 0.0
      %1502 = vmatprep.subr.mxu0 0.0
      %1503 = vmatpush2.msra.mxu0 0.0
      %1504 = vmatprep.subr.mxu0 0.0
      %1505 = vmatpush2.msra.mxu0 0.0
      %1506 = vmatprep.subr.mxu0 0.0
      %1507 = vmatpush2.msra.mxu0 0.0
      %1508 = vmatprep.subr.mxu0 0.0
      %1509 = vmatpush2.msra.mxu0 0.0
      %1510 = vmatprep.subr.mxu0 0.0
      %1511 = vmatpush2.msra.mxu0 0.0
      %1512 = vmatprep.subr.mxu0 0.0
      %1513 = vmatpush2.msra.mxu0 0.0
      %1514 = vmatprep.subr.mxu0 0.0
      %1515 = vmatpush2.msra.mxu0 0.0
      %1516 = vmatprep.subr.mxu0 0.0
      %1517 = vmatpush2.msra.mxu0 0.0
      %1518 = vmatprep.subr.mxu0 0.0
      %1519 = vmatpush2.msra.mxu0 0.0
      %1520 = vmatprep.subr.mxu0 0.0
      %1521 = vmatpush2.msra.mxu0 0.0
      %1522 = vmatprep.subr.mxu0 0.0
      %1523 = vmatpush2.msra.mxu0 0.0
      %1524 = vmatprep.subr.mxu0 0.0
      %1525 = vmatpush2.msra.mxu0 0.0
      %1526 = vmatprep.mubr.f32.mxu0 0.0
      %1527 = vmatmul.mubr.f32.gmra.mxu0 %v1247
      %v1528 = vpop.f32.mrf.mxu0
      %v1529 = vadd.f32 0.0, %v1528
      %v1530 = vpop.f32.mrf.mxu0
      %v1531 = vadd.f32 0.0, %v1530
      %1532 = vdwg.mxu0
      %v1533 = vadd.f32 %v443, %v1316
      %v1534 = vadd.f32 %v444, %v1318
      %v1535 = vadd.f32 %v445, %v1387
      %v1536 = vadd.f32 %v446, %v1389
      %v1537 = vadd.f32 %v447, %v1458
      %v1538 = vadd.f32 %v448, %v1460
      %v1539 = vadd.f32 %v449, %v1529
      %v1540 = vadd.f32 %v450, %v1531
      %1541 = vst [vmem:[%s199] sm:$0xff] %v1533
      %1542 = vst [vmem:[%s199 + $0x8] sm:$0xff] %v1534
      %1543 = vst [vmem:[%s199 + $0x10] sm:$0xff] %v1535
      %1544 = vst [vmem:[%s199 + $0x18] sm:$0xff] %v1536
      %1545 = vst [vmem:[%s199 + $0x20] sm:$0xff] %v1537
      %1546 = vst [vmem:[%s199 + $0x28] sm:$0xff] %v1538
      %1547 = vst [vmem:[%s199 + $0x30] sm:$0xff] %v1539
      %1548 = vst [vmem:[%s199 + $0x38] sm:$0xff] %v1540
      %s1549 = smul.u32 8, %s15
      %p1550 = scmp.lt.s32.totalorder %s1549, 15
      %s1551 = scalar_select %p1550, %s1549, 15
      %s1552 = smul.addr %s1551, 8
      %s1553 = scalar_lea.vmem %s4, %s1552
      // Predicated region
      $region37: #{nca_forward.1} parent=35 // pred_check
        %p1554 = pneg %p122
      $region38: #{nca_forward.1} parent=35 // pred_check_branch
        %1556 = sbr.rel (%p1554) target = $region40
      $region39: #{nca_forward.1} parent=35 // pred_region
        %s1557 = smul.u32 8, %s15
      $region40: #{nca_forward.1} parent=35 // pred_fallthru
        _
    $region36: #{nca_forward.1} parent=5 // pred_fallthru
      _
    %p1558 = scmp.le.s32.totalorder 2, %s10
    // Predicated region
    $region41: #{nca_forward.1} parent=5 // pred_check
      %p1559 = pneg %p1558
    $region42: #{nca_forward.1} parent=5 // pred_check_branch
      %1561 = sbr.rel (%p1559) target = $region44
    $region43: #{nca_forward.1} parent=5 // pred_region
      %s1562 = ssub.s32 %s10, 2
      // Predicated region
      $region45: #{nca_forward.1} parent=43 // pred_check
        %p1563 = pneg %p128
      $region46: #{nca_forward.1} parent=43 // pred_check_branch
        %1565 = sbr.rel (%p1563) target = $region48
      $region47: #{nca_forward.1} parent=43 // pred_region
        %s1566 = smul.u32 8, %s16
        %p1567 = scmp.lt.s32.totalorder %s1566, 15
        %s1568 = scalar_select %p1567, %s1566, 15
        %s1569 = smul.addr %s1568, 8
        %s1570 = scalar_lea.vmem %s4, %s1569
      $region48: #{nca_forward.1} parent=43 // pred_fallthru
        _
    $region44: #{nca_forward.1} parent=5 // pred_fallthru
      _
  $region6: #{nca_forward.1} parent=0 // loop_footer
    %s14 = sadd.s32 1, %s10
  $region7: #{nca_forward.1} parent=0 // loop_footer_branch
    %9 = sbr.rel target = $region3
  $region8: #{nca_forward.1} parent=0 // loop_exit
    _

</llo_original>
